<compile_context>
chip_gen: v5e
topology: v5e:2x2
jax: 0.10.0
libtpu: 0.0.40
codegen_flags: <defaults>
</compile_context>

<pallas_src>
import jax
import jax.numpy as jnp
from jax.experimental import pallas as pl
from jax.experimental.pallas import tpu as pltpu

CLASSES = ["BA", "EO", "LY", "MO", "BNE", "SNE"]
BNE_INDEX = CLASSES.index("BNE")      # 4
SNE_INDEX = CLASSES.index("SNE")      # 5
N_CLASSES = len(CLASSES)              # 6
HIDDEN = 32                           # per-head hidden width (fused: 64)

_LANE = 128
_X_DOUBLE_BUFFER_BUDGET = 24 * 1024 * 1024   # bytes for the 2x double-buffered f32 x tile
_VMEM_LIMIT = 48 * 1024 * 1024               # explicit scoped VMEM (< v7x 64 MiB physical)


def _round_up(x, m):
    return (x + m - 1) // m * m


def _pick_tile_b(batch, d):
    """Largest batch tile (multiple of 128, <=1024) whose double-buffered f32
    tile fits the VMEM budget; 128-multiple keeps the output block lane-dense."""
    tb = _X_DOUBLE_BUFFER_BUDGET // (2 * d * 4)
    tb = min(tb, 1024, _round_up(batch, _LANE))
    tb = max(_LANE, (tb // _LANE) * _LANE)
    return int(tb)


def _argmax_rows(logits):
    """First-occurrence argmax along axis=1 (torch.argmax semantics). [T,1] i32."""
    n = logits.shape[1]
    ids = jax.lax.broadcasted_iota(jnp.int32, logits.shape, 1)
    maxv = jnp.max(logits, axis=1, keepdims=True)
    cand = jnp.where(logits == maxv, ids, n)
    return jnp.min(cand, axis=1, keepdims=True)


def _col_to_row(col_f32):
    """[T,1] f32 column -> [1,T] f32 lane-dense row.

    Avoids an XLU transpose of an oddly shaped array: per 128-row chunk,
    lane-broadcast the column, keep the diagonal, reduce over sublanes.
    All ops (iota, compare, select w/ lane-broadcast, sublane sum, lane concat)
    lower cleanly; cost is negligible vs. the x DMA.
    """
    t = col_f32.shape[0]
    r = jax.lax.broadcasted_iota(jnp.int32, (_LANE, _LANE), 0)
    c = jax.lax.broadcasted_iota(jnp.int32, (_LANE, _LANE), 1)
    diag = r == c
    chunks = []
    for j in range(t // _LANE):                                    # static python loop
        blk = col_f32[j * _LANE:(j + 1) * _LANE, :]                # [128,1]
        sel = jnp.where(diag, blk, 0.0)                            # lane-broadcast column
        chunks.append(jnp.sum(sel, axis=0, keepdims=True))         # [1,128]
    return chunks[0] if len(chunks) == 1 else jnp.concatenate(chunks, axis=1)


def fused_classifier_kernel(x_ref, w1_ref, b1_ref, w2_ref, b2_ref, out_ref):
    # x tile arrives f32 straight from HBM (no wrapper cast pass); bf16 cast is
    # free VPU filler hidden under the DMA of the next tile.
    x = x_ref[...].astype(jnp.bfloat16)                                   # [T, D]
    h = jnp.dot(x, w1_ref[...], preferred_element_type=jnp.float32)       # MXU, f32 acc
    h = jnp.maximum(h + b1_ref[...], 0.0)                                 # [T, 2H] f32

    # Fused second layer: cols 0:6 = WBC head, cols 6:8 = neutrophil head.
    logits = jnp.dot(h.astype(jnp.bfloat16), w2_ref[...],
                     preferred_element_type=jnp.float32) + b2_ref[...]    # [T, 8] f32

    wbc_type = _argmax_rows(logits[:, :N_CLASSES])                        # [T,1] i32
    neut_type = _argmax_rows(logits[:, N_CLASSES:N_CLASSES + 2])          # [T,1] i32

    neut_label = jnp.where(neut_type == 0, BNE_INDEX, SNE_INDEX)
    is_neut = (wbc_type == BNE_INDEX) | (wbc_type == SNE_INDEX)
    label = jnp.where(is_neut, neut_label, wbc_type).astype(jnp.float32)  # [T,1]

    # Lane-dense store: the (1, TILE_B) block writes back as an unmasked vst.
    out_ref[...] = _col_to_row(label).astype(jnp.int32)


def make_params(key, d_in):
    """Synthetic stand-ins for the two loaded state dicts (f32 master copies)."""
    ks = jax.random.split(key, 8)
    s = 0.05
    w1w = jax.random.normal(ks[0], (d_in, HIDDEN), jnp.float32) * s
    b1w = jax.random.normal(ks[1], (1, HIDDEN), jnp.float32) * s
    w2w = jax.random.normal(ks[2], (HIDDEN, N_CLASSES), jnp.float32) * s
    b2w = jax.random.normal(ks[3], (1, N_CLASSES), jnp.float32) * s
    w1n = jax.random.normal(ks[4], (d_in, HIDDEN), jnp.float32) * s
    b1n = jax.random.normal(ks[5], (1, HIDDEN), jnp.float32) * s
    w2n = jax.random.normal(ks[6], (HIDDEN, 2), jnp.float32) * s
    b2n = jax.random.normal(ks[7], (1, 2), jnp.float32) * s
    return (w1w, b1w, w2w, b2w, w1n, b1n, w2n, b2n)


def _fuse_params(params):
    """Fuse the two heads: one [D,64] first layer + block-diagonal [64,8] second."""
    w1w, b1w, w2w, b2w, w1n, b1n, w2n, b2n = params
    w1f = jnp.concatenate([w1w, w1n], axis=1).astype(jnp.bfloat16)     # [D, 2H] bf16
    b1f = jnp.concatenate([b1w, b1n], axis=1).astype(jnp.float32)      # [1, 2H]
    w2f = jnp.zeros((2 * HIDDEN, N_CLASSES + 2), jnp.float32)
    w2f = w2f.at[:HIDDEN, :N_CLASSES].set(w2w)
    w2f = w2f.at[HIDDEN:, N_CLASSES:].set(w2n)
    w2f = w2f.astype(jnp.bfloat16)                                     # [2H, 8] bf16
    b2f = jnp.concatenate([b2w, b2n], axis=1).astype(jnp.float32)      # [1, 8]
    return w1f, b1f, w2f, b2f


def _const_spec(shape):
    # Weights/biases: constant index_map -> VMEM-resident across grid steps;
    # Buffered(1) drops the redundant second pipeline buffer.
    try:
        return pl.BlockSpec(shape, lambda i: (0, 0), pipeline_mode=pl.Buffered(1))
    except TypeError:  # pipeline_mode not supported by this BlockSpec version
        return pl.BlockSpec(shape, lambda i: (0, 0))


@jax.jit
def complete_classifier(x_nchw, params):
    B = x_nchw.shape[0]
    x_flat = x_nchw.reshape(B, -1)            # NCHW flatten (torch .view order), stays f32
    D = x_flat.shape[1]

    tile_b = _pick_tile_b(B, D)
    n_tiles = pl.cdiv(B, tile_b)
    b_pad = n_tiles * tile_b
    if b_pad != B:                            # pad only when the batch is ragged
        x_flat = jnp.pad(x_flat, ((0, b_pad - B), (0, 0)))

    w1f, b1f, w2f, b2f = _fuse_params(params)

    out = pl.pallas_call(
        fused_classifier_kernel,
        out_shape=jax.ShapeDtypeStruct((n_tiles, tile_b), jnp.int32),
        grid=(n_tiles,),
        in_specs=[
            pl.BlockSpec((tile_b, D), lambda i: (i, 0)),   # x: double-buffered batch tiles
            _const_spec(w1f.shape),
            _const_spec(b1f.shape),
            _const_spec(w2f.shape),
            _const_spec(b2f.shape),
        ],
        out_specs=pl.BlockSpec((1, tile_b), lambda i: (i, 0)),  # lane-dense output row
        compiler_params=pltpu.CompilerParams(
            dimension_semantics=("parallel",),   # megacore batch sharding on v7x
            vmem_limit_bytes=_VMEM_LIMIT,
        ),
    )(x_flat, w1f, b1f, w2f, b2f)

    return out.reshape(-1)[:B]                 # [B] int32 labels (torch argmax is int64)


def reference(x_nchw, params):
    """Pure-JAX reference with identical math (same fused bf16 weights)."""
    w1f, b1f, w2f, b2f = _fuse_params(params)
    xf = x_nchw.reshape(x_nchw.shape[0], -1).astype(jnp.bfloat16)
    h = jnp.maximum(jnp.dot(xf, w1f, preferred_element_type=jnp.float32) + b1f, 0.0)
    logits = jnp.dot(h.astype(jnp.bfloat16), w2f,
                     preferred_element_type=jnp.float32) + b2f
    wt = jnp.argmax(logits[:, :N_CLASSES], axis=1).astype(jnp.int32)
    nt = jnp.argmax(logits[:, N_CLASSES:N_CLASSES + 2], axis=1).astype(jnp.int32)
    nlabel = jnp.where(nt == 0, BNE_INDEX, SNE_INDEX)
    mask = (wt == BNE_INDEX) | (wt == SNE_INDEX)
    return jnp.where(mask, nlabel, wt).astype(jnp.int32)


if __name__ == "__main__":
    key = jax.random.PRNGKey(0)
    kx, kp = jax.random.split(key)

    B, C, H, W = 2, 4, 16, 16
    x = jax.random.normal(kx, (B, C, H, W), jnp.float32)
    params = make_params(kp, C * H * W)

    out = complete_classifier(x, params)
    out = jax.block_until_ready(out)

    ref = reference(x, params)
    assert out.shape == (B,) and out.dtype == jnp.int32
    assert bool(jnp.all(out == ref)), (out, ref)

    print("KERNEL_OK")
</pallas_src>

<mosaic_0001>
module attributes {stable_mosaic.version = 11 : i64} {
  func.func @fused_classifier_kernel(%arg0: i32, %arg1: memref<128x1024xf32, #tpu.memory_space<vmem>>, %arg2: memref<1024x64xbf16, #tpu.memory_space<vmem>>, %arg3: memref<1x64xf32, #tpu.memory_space<vmem>>, %arg4: memref<64x8xbf16, #tpu.memory_space<vmem>>, %arg5: memref<1x8xf32, #tpu.memory_space<vmem>>, %arg6: memref<1x128xi32, #tpu.memory_space<vmem>>) attributes {dimension_semantics = [#tpu.dimension_semantics<parallel>], iteration_bounds = array<i64: 1>, scalar_prefetch = 0 : i64, scratch_operands = 0 : i64, tpu.core_type = #tpu.core_type<tc>, window_params = [{transform_indices = @transform_0, window_bounds = array<i64: 128, 1024>}, {pipeline_mode = #tpu.pipeline_mode<synchronous>, transform_indices = @transform_1, window_bounds = array<i64: 1024, 64>}, {pipeline_mode = #tpu.pipeline_mode<synchronous>, transform_indices = @transform_2, window_bounds = array<i64: 1, 64>}, {pipeline_mode = #tpu.pipeline_mode<synchronous>, transform_indices = @transform_3, window_bounds = array<i64: 64, 8>}, {pipeline_mode = #tpu.pipeline_mode<synchronous>, transform_indices = @transform_4, window_bounds = array<i64: 1, 8>}, {transform_indices = @transform_5, window_bounds = array<i64: 1, 128>}]} {
    %c0 = arith.constant 0 : index
    %c0_0 = arith.constant 0 : index
    %0 = vector.load %arg1[%c0, %c0_0] : memref<128x1024xf32, #tpu.memory_space<vmem>>, vector<128x1024xf32>
    %1 = arith.truncf %0 : vector<128x1024xf32> to vector<128x1024xbf16>
    %c0_1 = arith.constant 0 : index
    %c0_2 = arith.constant 0 : index
    %2 = vector.load %arg2[%c0_1, %c0_2] : memref<1024x64xbf16, #tpu.memory_space<vmem>>, vector<1024x64xbf16>
    %cst = arith.constant dense<0.000000e+00> : vector<128x64xf32>
    %3 = tpu.matmul %1, %2, %cst {dimension_numbers = #tpu.dot_dimension_numbers<[1], [0], [0], [1], [0, 0, 1, 1], [], []>} : vector<128x1024xbf16>, vector<1024x64xbf16>, vector<128x64xf32> -> vector<128x64xf32>
    %c0_3 = arith.constant 0 : index
    %c0_4 = arith.constant 0 : index
    %4 = vector.load %arg3[%c0_3, %c0_4] : memref<1x64xf32, #tpu.memory_space<vmem>>, vector<1x64xf32>
    %5 = vector.broadcast %4 : vector<1x64xf32> to vector<128x64xf32>
    %6 = arith.addf %3, %5 : vector<128x64xf32>
    %cst_5 = arith.constant 0.000000e+00 : f32
    %7 = vector.broadcast %cst_5 : f32 to vector<128x64xf32>
    %8 = arith.maximumf %6, %7 : vector<128x64xf32>
    %9 = arith.truncf %8 : vector<128x64xf32> to vector<128x64xbf16>
    %c0_6 = arith.constant 0 : index
    %c0_7 = arith.constant 0 : index
    %10 = vector.load %arg4[%c0_6, %c0_7] : memref<64x8xbf16, #tpu.memory_space<vmem>>, vector<64x8xbf16>
    %cst_8 = arith.constant dense<0.000000e+00> : vector<128x8xf32>
    %11 = tpu.matmul %9, %10, %cst_8 {dimension_numbers = #tpu.dot_dimension_numbers<[1], [0], [0], [1], [0, 0, 1, 1], [], []>} : vector<128x64xbf16>, vector<64x8xbf16>, vector<128x8xf32> -> vector<128x8xf32>
    %c0_9 = arith.constant 0 : index
    %c0_10 = arith.constant 0 : index
    %12 = vector.load %arg5[%c0_9, %c0_10] : memref<1x8xf32, #tpu.memory_space<vmem>>, vector<1x8xf32>
    %13 = vector.broadcast %12 : vector<1x8xf32> to vector<128x8xf32>
    %14 = arith.addf %11, %13 : vector<128x8xf32>
    %15 = vector.extract_strided_slice %14 {offsets = [0, 0], sizes = [128, 6], strides = [1, 1]} : vector<128x8xf32> to vector<128x6xf32>
    %16 = tpu.iota {dimensions = array<i32: 1>} : vector<128x6xi32>
    %cst_11 = arith.constant dense<0xFF800000> : vector<128xf32>
    %17 = vector.multi_reduction <maximumf>, %15, %cst_11 [1] : vector<128x6xf32> to vector<128xf32>
    %18 = vector.shape_cast %17 : vector<128xf32> to vector<128x1xf32>
    %19 = vector.broadcast %18 : vector<128x1xf32> to vector<128x6xf32>
    %20 = arith.cmpf oeq, %15, %19 : vector<128x6xf32>
    %c6_i32 = arith.constant 6 : i32
    %21 = vector.broadcast %c6_i32 : i32 to vector<128x6xi32>
    %22 = arith.select %20, %16, %21 : vector<128x6xi1>, vector<128x6xi32>
    %cst_12 = arith.constant dense<2147483647> : vector<128xi32>
    %23 = vector.multi_reduction <minsi>, %22, %cst_12 [1] : vector<128x6xi32> to vector<128xi32>
    %24 = vector.shape_cast %23 : vector<128xi32> to vector<128x1xi32>
    %25 = vector.extract_strided_slice %14 {offsets = [0, 6], sizes = [128, 2], strides = [1, 1]} : vector<128x8xf32> to vector<128x2xf32>
    %26 = tpu.iota {dimensions = array<i32: 1>} : vector<128x2xi32>
    %cst_13 = arith.constant dense<0xFF800000> : vector<128xf32>
    %27 = vector.multi_reduction <maximumf>, %25, %cst_13 [1] : vector<128x2xf32> to vector<128xf32>
    %28 = vector.shape_cast %27 : vector<128xf32> to vector<128x1xf32>
    %29 = vector.broadcast %28 : vector<128x1xf32> to vector<128x2xf32>
    %30 = arith.cmpf oeq, %25, %29 : vector<128x2xf32>
    %c2_i32 = arith.constant 2 : i32
    %31 = vector.broadcast %c2_i32 : i32 to vector<128x2xi32>
    %32 = arith.select %30, %26, %31 : vector<128x2xi1>, vector<128x2xi32>
    %cst_14 = arith.constant dense<2147483647> : vector<128xi32>
    %33 = vector.multi_reduction <minsi>, %32, %cst_14 [1] : vector<128x2xi32> to vector<128xi32>
    %34 = vector.shape_cast %33 : vector<128xi32> to vector<128x1xi32>
    %c0_i32 = arith.constant 0 : i32
    %35 = vector.broadcast %c0_i32 : i32 to vector<128x1xi32>
    %36 = arith.cmpi eq, %34, %35 : vector<128x1xi32>
    %c4_i32 = arith.constant 4 : i32
    %c5_i32 = arith.constant 5 : i32
    %37 = vector.broadcast %c4_i32 : i32 to vector<128x1xi32>
    %38 = vector.broadcast %c5_i32 : i32 to vector<128x1xi32>
    %39 = arith.select %36, %37, %38 : vector<128x1xi1>, vector<128x1xi32>
    %c4_i32_15 = arith.constant 4 : i32
    %40 = vector.broadcast %c4_i32_15 : i32 to vector<128x1xi32>
    %41 = arith.cmpi eq, %24, %40 : vector<128x1xi32>
    %c5_i32_16 = arith.constant 5 : i32
    %42 = vector.broadcast %c5_i32_16 : i32 to vector<128x1xi32>
    %43 = arith.cmpi eq, %24, %42 : vector<128x1xi32>
    %44 = arith.ori %41, %43 : vector<128x1xi1>
    %45 = arith.select %44, %39, %24 : vector<128x1xi1>, vector<128x1xi32>
    %46 = arith.sitofp %45 : vector<128x1xi32> to vector<128x1xf32>
    %47 = tpu.iota {dimensions = array<i32: 0>} : vector<128x128xi32>
    %48 = tpu.iota {dimensions = array<i32: 1>} : vector<128x128xi32>
    %49 = arith.cmpi eq, %47, %48 : vector<128x128xi32>
    %cst_17 = arith.constant 0.000000e+00 : f32
    %50 = vector.shape_cast %46 : vector<128x1xf32> to vector<128x1xf32>
    %51 = vector.broadcast %50 : vector<128x1xf32> to vector<128x128xf32>
    %52 = vector.broadcast %cst_17 : f32 to vector<128x128xf32>
    %53 = arith.select %49, %51, %52 : vector<128x128xi1>, vector<128x128xf32>
    %cst_18 = arith.constant dense<0.000000e+00> : vector<128xf32>
    %54 = vector.multi_reduction <add>, %53, %cst_18 [0] : vector<128x128xf32> to vector<128xf32>
    %55 = vector.shape_cast %54 : vector<128xf32> to vector<1x128xf32>
    %56 = arith.fptosi %55 : vector<1x128xf32> to vector<1x128xi32>
    %c0_19 = arith.constant 0 : index
    %c0_20 = arith.constant 0 : index
    %57 = vector.load %arg6[%c0_19, %c0_20] : memref<1x128xi32, #tpu.memory_space<vmem>>, vector<1x128xi32>
    tpu.vector_store %arg6[%c0_19, %c0_20], %56 {strides = array<i32>} : memref<1x128xi32, #tpu.memory_space<vmem>>, vector<1x128xi32>,
    return
  }
  func.func @transform_0(%arg0: i32) -> (i32, i32) {
    %c0_i32 = arith.constant 0 : i32
    %c0_i32_0 = arith.constant 0 : i32
    return %arg0, %c0_i32 : i32, i32
  }
  func.func @transform_1(%arg0: i32) -> (i32, i32) {
    %c0_i32 = arith.constant 0 : i32
    %c0_i32_0 = arith.constant 0 : i32
    %c0_i32_1 = arith.constant 0 : i32
    return %c0_i32, %c0_i32_0 : i32, i32
  }
  func.func @transform_2(%arg0: i32) -> (i32, i32) {
    %c0_i32 = arith.constant 0 : i32
    %c0_i32_0 = arith.constant 0 : i32
    %c0_i32_1 = arith.constant 0 : i32
    return %c0_i32, %c0_i32_0 : i32, i32
  }
  func.func @transform_3(%arg0: i32) -> (i32, i32) {
    %c0_i32 = arith.constant 0 : i32
    %c0_i32_0 = arith.constant 0 : i32
    %c0_i32_1 = arith.constant 0 : i32
    return %c0_i32, %c0_i32_0 : i32, i32
  }
  func.func @transform_4(%arg0: i32) -> (i32, i32) {
    %c0_i32 = arith.constant 0 : i32
    %c0_i32_0 = arith.constant 0 : i32
    %c0_i32_1 = arith.constant 0 : i32
    return %c0_i32, %c0_i32_0 : i32, i32
  }
  func.func @transform_5(%arg0: i32) -> (i32, i32) {
    %c0_i32 = arith.constant 0 : i32
    %c0_i32_0 = arith.constant 0 : i32
    return %arg0, %c0_i32 : i32, i32
  }
}

</mosaic_0001>

<llo_original>
// kernel: complete_classifier.1
$region0: #{complete_classifier.1}
  #allocation0 [shape = 'u32[]', space=smem, size = 0x4, offset = 0x4, fixed_abs, tag = 'smem constant byte address 0x4 - core index']
  #allocation1 [shape = 'u32[72,128]{1,0:T(1,128)}', space=vmem, size = 0x9000, scoped, tag = 'internal scratch']
  %s0 = inlined_call_operand.vmem [shape: f32[128,1024], index: 0, kind: input, shape index: {}]
  %s1 = inlined_call_operand.vmem [shape: bf16[1024,64], index: 1, kind: input, shape index: {}]
  %s2 = inlined_call_operand.vmem [shape: f32[1,64], index: 2, kind: input, shape index: {}]
  %s3 = inlined_call_operand.vmem [shape: bf16[64,8], index: 3, kind: input, shape index: {}]
  %s4 = inlined_call_operand.vmem [shape: f32[1,8], index: 4, kind: input, shape index: {}]
  %s5 = inlined_call_operand.vmem [shape: s32[1,128], index: 5, kind: output, shape index: {}]
  %s6 = sld [smem:[#allocation0]]
  $region30: #{complete_classifier.1} parent=0
    _
  %s8 = ssub.s32 1, %s6
  %s9 = scalar_select 0, %s8, %s6
  // Predicated region
  $region2: #{complete_classifier.1} parent=0 // pred_check
    _
  $region3: #{complete_classifier.1} parent=0 // pred_check_branch
    %11 = sbr.rel (0) target = $region5
  $region4: #{complete_classifier.1} parent=0 // pred_region
    _
  $region5: #{complete_classifier.1} parent=0 // pred_fallthru
    _
  // Predicated region
  $region6: #{complete_classifier.1} parent=0 // pred_check
    _
  $region7: #{complete_classifier.1} parent=0 // pred_check_branch
    %13 = sbr.rel (0) target = $region9
  $region8: #{complete_classifier.1} parent=0 // pred_region
    _
  $region9: #{complete_classifier.1} parent=0 // pred_fallthru
    _
  // Predicated region
  $region10: #{complete_classifier.1} parent=0 // pred_check
    _
  $region11: #{complete_classifier.1} parent=0 // pred_check_branch
    %15 = sbr.rel (0) target = $region13
  $region12: #{complete_classifier.1} parent=0 // pred_region
    _
  $region13: #{complete_classifier.1} parent=0 // pred_fallthru
    _
  // Predicated region
  $region14: #{complete_classifier.1} parent=0 // pred_check
    _
  $region15: #{complete_classifier.1} parent=0 // pred_check_branch
    %17 = sbr.rel (0) target = $region17
  $region16: #{complete_classifier.1} parent=0 // pred_region
    _
  $region17: #{complete_classifier.1} parent=0 // pred_fallthru
    _
  // Predicated region
  $region18: #{complete_classifier.1} parent=0 // pred_check
    _
  $region19: #{complete_classifier.1} parent=0 // pred_check_branch
    %19 = sbr.rel (0) target = $region21
  $region20: #{complete_classifier.1} parent=0 // pred_region
    _
  $region21: #{complete_classifier.1} parent=0 // pred_fallthru
    _
  %v21 = vld [vmem:[%s0] sm:$0xff]
  %v22 = vld [vmem:[%s0 + $0x8] sm:$0xff]
  %v23 = vld [vmem:[%s0 + $0x10] sm:$0xff]
  %v24 = vld [vmem:[%s0 + $0x18] sm:$0xff]
  %v25 = vld [vmem:[%s0 + $0x20] sm:$0xff]
  %v26 = vld [vmem:[%s0 + $0x28] sm:$0xff]
  %v27 = vld [vmem:[%s0 + $0x30] sm:$0xff]
  %v28 = vld [vmem:[%s0 + $0x38] sm:$0xff]
  %v29 = vld [vmem:[%s0 + $0x40] sm:$0xff]
  %v30 = vld [vmem:[%s0 + $0x48] sm:$0xff]
  %v31 = vld [vmem:[%s0 + $0x50] sm:$0xff]
  %v32 = vld [vmem:[%s0 + $0x58] sm:$0xff]
  %v33 = vld [vmem:[%s0 + $0x60] sm:$0xff]
  %v34 = vld [vmem:[%s0 + $0x68] sm:$0xff]
  %v35 = vld [vmem:[%s0 + $0x70] sm:$0xff]
  %v36 = vld [vmem:[%s0 + $0x78] sm:$0xff]
  %v37 = vld [vmem:[%s0 + $0x80] sm:$0xff]
  %v38 = vld [vmem:[%s0 + $0x88] sm:$0xff]
  %v39 = vld [vmem:[%s0 + $0x90] sm:$0xff]
  %v40 = vld [vmem:[%s0 + $0x98] sm:$0xff]
  %v41 = vld [vmem:[%s0 + $0xa0] sm:$0xff]
  %v42 = vld [vmem:[%s0 + $0xa8] sm:$0xff]
  %v43 = vld [vmem:[%s0 + $0xb0] sm:$0xff]
  %v44 = vld [vmem:[%s0 + $0xb8] sm:$0xff]
  %v45 = vld [vmem:[%s0 + $0xc0] sm:$0xff]
  %v46 = vld [vmem:[%s0 + $0xc8] sm:$0xff]
  %v47 = vld [vmem:[%s0 + $0xd0] sm:$0xff]
  %v48 = vld [vmem:[%s0 + $0xd8] sm:$0xff]
  %v49 = vld [vmem:[%s0 + $0xe0] sm:$0xff]
  %v50 = vld [vmem:[%s0 + $0xe8] sm:$0xff]
  %v51 = vld [vmem:[%s0 + $0xf0] sm:$0xff]
  %v52 = vld [vmem:[%s0 + $0xf8] sm:$0xff]
  %v53 = vld [vmem:[%s0 + $0x100] sm:$0xff]
  %v54 = vld [vmem:[%s0 + $0x108] sm:$0xff]
  %v55 = vld [vmem:[%s0 + $0x110] sm:$0xff]
  %v56 = vld [vmem:[%s0 + $0x118] sm:$0xff]
  %v57 = vld [vmem:[%s0 + $0x120] sm:$0xff]
  %v58 = vld [vmem:[%s0 + $0x128] sm:$0xff]
  %v59 = vld [vmem:[%s0 + $0x130] sm:$0xff]
  %v60 = vld [vmem:[%s0 + $0x138] sm:$0xff]
  %v61 = vld [vmem:[%s0 + $0x140] sm:$0xff]
  %v62 = vld [vmem:[%s0 + $0x148] sm:$0xff]
  %v63 = vld [vmem:[%s0 + $0x150] sm:$0xff]
  %v64 = vld [vmem:[%s0 + $0x158] sm:$0xff]
  %v65 = vld [vmem:[%s0 + $0x160] sm:$0xff]
  %v66 = vld [vmem:[%s0 + $0x168] sm:$0xff]
  %v67 = vld [vmem:[%s0 + $0x170] sm:$0xff]
  %v68 = vld [vmem:[%s0 + $0x178] sm:$0xff]
  %v69 = vld [vmem:[%s0 + $0x180] sm:$0xff]
  %v70 = vld [vmem:[%s0 + $0x188] sm:$0xff]
  %v71 = vld [vmem:[%s0 + $0x190] sm:$0xff]
  %v72 = vld [vmem:[%s0 + $0x198] sm:$0xff]
  %v73 = vld [vmem:[%s0 + $0x1a0] sm:$0xff]
  %v74 = vld [vmem:[%s0 + $0x1a8] sm:$0xff]
  %v75 = vld [vmem:[%s0 + $0x1b0] sm:$0xff]
  %v76 = vld [vmem:[%s0 + $0x1b8] sm:$0xff]
  %v77 = vld [vmem:[%s0 + $0x1c0] sm:$0xff]
  %v78 = vld [vmem:[%s0 + $0x1c8] sm:$0xff]
  %v79 = vld [vmem:[%s0 + $0x1d0] sm:$0xff]
  %v80 = vld [vmem:[%s0 + $0x1d8] sm:$0xff]
  %v81 = vld [vmem:[%s0 + $0x1e0] sm:$0xff]
  %v82 = vld [vmem:[%s0 + $0x1e8] sm:$0xff]
  %v83 = vld [vmem:[%s0 + $0x1f0] sm:$0xff]
  %v84 = vld [vmem:[%s0 + $0x1f8] sm:$0xff]
  %v85 = vld [vmem:[%s0 + $0x200] sm:$0xff]
  %v86 = vld [vmem:[%s0 + $0x208] sm:$0xff]
  %v87 = vld [vmem:[%s0 + $0x210] sm:$0xff]
  %v88 = vld [vmem:[%s0 + $0x218] sm:$0xff]
  %v89 = vld [vmem:[%s0 + $0x220] sm:$0xff]
  %v90 = vld [vmem:[%s0 + $0x228] sm:$0xff]
  %v91 = vld [vmem:[%s0 + $0x230] sm:$0xff]
  %v92 = vld [vmem:[%s0 + $0x238] sm:$0xff]
  %v93 = vld [vmem:[%s0 + $0x240] sm:$0xff]
  %v94 = vld [vmem:[%s0 + $0x248] sm:$0xff]
  %v95 = vld [vmem:[%s0 + $0x250] sm:$0xff]
  %v96 = vld [vmem:[%s0 + $0x258] sm:$0xff]
  %v97 = vld [vmem:[%s0 + $0x260] sm:$0xff]
  %v98 = vld [vmem:[%s0 + $0x268] sm:$0xff]
  %v99 = vld [vmem:[%s0 + $0x270] sm:$0xff]
  %v100 = vld [vmem:[%s0 + $0x278] sm:$0xff]
  %v101 = vld [vmem:[%s0 + $0x280] sm:$0xff]
  %v102 = vld [vmem:[%s0 + $0x288] sm:$0xff]
  %v103 = vld [vmem:[%s0 + $0x290] sm:$0xff]
  %v104 = vld [vmem:[%s0 + $0x298] sm:$0xff]
  %v105 = vld [vmem:[%s0 + $0x2a0] sm:$0xff]
  %v106 = vld [vmem:[%s0 + $0x2a8] sm:$0xff]
  %v107 = vld [vmem:[%s0 + $0x2b0] sm:$0xff]
  %v108 = vld [vmem:[%s0 + $0x2b8] sm:$0xff]
  %v109 = vld [vmem:[%s0 + $0x2c0] sm:$0xff]
  %v110 = vld [vmem:[%s0 + $0x2c8] sm:$0xff]
  %v111 = vld [vmem:[%s0 + $0x2d0] sm:$0xff]
  %v112 = vld [vmem:[%s0 + $0x2d8] sm:$0xff]
  %v113 = vld [vmem:[%s0 + $0x2e0] sm:$0xff]
  %v114 = vld [vmem:[%s0 + $0x2e8] sm:$0xff]
  %v115 = vld [vmem:[%s0 + $0x2f0] sm:$0xff]
  %v116 = vld [vmem:[%s0 + $0x2f8] sm:$0xff]
  %v117 = vld [vmem:[%s0 + $0x300] sm:$0xff]
  %v118 = vld [vmem:[%s0 + $0x308] sm:$0xff]
  %v119 = vld [vmem:[%s0 + $0x310] sm:$0xff]
  %v120 = vld [vmem:[%s0 + $0x318] sm:$0xff]
  %v121 = vld [vmem:[%s0 + $0x320] sm:$0xff]
  %v122 = vld [vmem:[%s0 + $0x328] sm:$0xff]
  %v123 = vld [vmem:[%s0 + $0x330] sm:$0xff]
  %v124 = vld [vmem:[%s0 + $0x338] sm:$0xff]
  %v125 = vld [vmem:[%s0 + $0x340] sm:$0xff]
  %v126 = vld [vmem:[%s0 + $0x348] sm:$0xff]
  %v127 = vld [vmem:[%s0 + $0x350] sm:$0xff]
  %v128 = vld [vmem:[%s0 + $0x358] sm:$0xff]
  %v129 = vld [vmem:[%s0 + $0x360] sm:$0xff]
  %v130 = vld [vmem:[%s0 + $0x368] sm:$0xff]
  %v131 = vld [vmem:[%s0 + $0x370] sm:$0xff]
  %v132 = vld [vmem:[%s0 + $0x378] sm:$0xff]
  %v133 = vld [vmem:[%s0 + $0x380] sm:$0xff]
  %v134 = vld [vmem:[%s0 + $0x388] sm:$0xff]
  %v135 = vld [vmem:[%s0 + $0x390] sm:$0xff]
  %v136 = vld [vmem:[%s0 + $0x398] sm:$0xff]
  %v137 = vld [vmem:[%s0 + $0x3a0] sm:$0xff]
  %v138 = vld [vmem:[%s0 + $0x3a8] sm:$0xff]
  %v139 = vld [vmem:[%s0 + $0x3b0] sm:$0xff]
  %v140 = vld [vmem:[%s0 + $0x3b8] sm:$0xff]
  %v141 = vld [vmem:[%s0 + $0x3c0] sm:$0xff]
  %v142 = vld [vmem:[%s0 + $0x3c8] sm:$0xff]
  %v143 = vld [vmem:[%s0 + $0x3d0] sm:$0xff]
  %v144 = vld [vmem:[%s0 + $0x3d8] sm:$0xff]
  %v145 = vld [vmem:[%s0 + $0x3e0] sm:$0xff]
  %v146 = vld [vmem:[%s0 + $0x3e8] sm:$0xff]
  %v147 = vld [vmem:[%s0 + $0x3f0] sm:$0xff]
  %v148 = vld [vmem:[%s0 + $0x3f8] sm:$0xff]
  %v149 = vpack.c.bf16 %v29, %v21
  %v150 = vpack.c.bf16 %v30, %v22
  %v151 = vpack.c.bf16 %v31, %v23
  %v152 = vpack.c.bf16 %v32, %v24
  %v153 = vpack.c.bf16 %v33, %v25
  %v154 = vpack.c.bf16 %v34, %v26
  %v155 = vpack.c.bf16 %v35, %v27
  %v156 = vpack.c.bf16 %v36, %v28
  %v157 = vpack.c.bf16 %v45, %v37
  %v158 = vpack.c.bf16 %v46, %v38
  %v159 = vpack.c.bf16 %v47, %v39
  %v160 = vpack.c.bf16 %v48, %v40
  %v161 = vpack.c.bf16 %v49, %v41
  %v162 = vpack.c.bf16 %v50, %v42
  %v163 = vpack.c.bf16 %v51, %v43
  %v164 = vpack.c.bf16 %v52, %v44
  %v165 = vpack.c.bf16 %v61, %v53
  %v166 = vpack.c.bf16 %v62, %v54
  %v167 = vpack.c.bf16 %v63, %v55
  %v168 = vpack.c.bf16 %v64, %v56
  %v169 = vpack.c.bf16 %v65, %v57
  %v170 = vpack.c.bf16 %v66, %v58
  %v171 = vpack.c.bf16 %v67, %v59
  %v172 = vpack.c.bf16 %v68, %v60
  %v173 = vpack.c.bf16 %v77, %v69
  %v174 = vpack.c.bf16 %v78, %v70
  %v175 = vpack.c.bf16 %v79, %v71
  %v176 = vpack.c.bf16 %v80, %v72
  %v177 = vpack.c.bf16 %v81, %v73
  %v178 = vpack.c.bf16 %v82, %v74
  %v179 = vpack.c.bf16 %v83, %v75
  %v180 = vpack.c.bf16 %v84, %v76
  %v181 = vpack.c.bf16 %v93, %v85
  %v182 = vpack.c.bf16 %v94, %v86
  %v183 = vpack.c.bf16 %v95, %v87
  %v184 = vpack.c.bf16 %v96, %v88
  %v185 = vpack.c.bf16 %v97, %v89
  %v186 = vpack.c.bf16 %v98, %v90
  %v187 = vpack.c.bf16 %v99, %v91
  %v188 = vpack.c.bf16 %v100, %v92
  %v189 = vpack.c.bf16 %v109, %v101
  %v190 = vpack.c.bf16 %v110, %v102
  %v191 = vpack.c.bf16 %v111, %v103
  %v192 = vpack.c.bf16 %v112, %v104
  %v193 = vpack.c.bf16 %v113, %v105
  %v194 = vpack.c.bf16 %v114, %v106
  %v195 = vpack.c.bf16 %v115, %v107
  %v196 = vpack.c.bf16 %v116, %v108
  %v197 = vpack.c.bf16 %v125, %v117
  %v198 = vpack.c.bf16 %v126, %v118
  %v199 = vpack.c.bf16 %v127, %v119
  %v200 = vpack.c.bf16 %v128, %v120
  %v201 = vpack.c.bf16 %v129, %v121
  %v202 = vpack.c.bf16 %v130, %v122
  %v203 = vpack.c.bf16 %v131, %v123
  %v204 = vpack.c.bf16 %v132, %v124
  %v205 = vpack.c.bf16 %v141, %v133
  %v206 = vpack.c.bf16 %v142, %v134
  %v207 = vpack.c.bf16 %v143, %v135
  %v208 = vpack.c.bf16 %v144, %v136
  %v209 = vpack.c.bf16 %v145, %v137
  %v210 = vpack.c.bf16 %v146, %v138
  %v211 = vpack.c.bf16 %v147, %v139
  %v212 = vpack.c.bf16 %v148, %v140
  %v213 = vld [vmem:[%s1] sm:$0xf]
  %v214 = vld [vmem:[%s1 + $0x4] sm:$0xf]
  %v215 = vld [vmem:[%s1 + $0x8] sm:$0xf]
  %v216 = vld [vmem:[%s1 + $0xc] sm:$0xf]
  %v217 = vld [vmem:[%s1 + $0x10] sm:$0xf]
  %v218 = vld [vmem:[%s1 + $0x14] sm:$0xf]
  %v219 = vld [vmem:[%s1 + $0x18] sm:$0xf]
  %v220 = vld [vmem:[%s1 + $0x1c] sm:$0xf]
  %v221 = vld [vmem:[%s1 + $0x20] sm:$0xf]
  %v222 = vld [vmem:[%s1 + $0x24] sm:$0xf]
  %v223 = vld [vmem:[%s1 + $0x28] sm:$0xf]
  %v224 = vld [vmem:[%s1 + $0x2c] sm:$0xf]
  %v225 = vld [vmem:[%s1 + $0x30] sm:$0xf]
  %v226 = vld [vmem:[%s1 + $0x34] sm:$0xf]
  %v227 = vld [vmem:[%s1 + $0x38] sm:$0xf]
  %v228 = vld [vmem:[%s1 + $0x3c] sm:$0xf]
  %v229 = vld [vmem:[%s1 + $0x40] sm:$0xf]
  %v230 = vld [vmem:[%s1 + $0x44] sm:$0xf]
  %v231 = vld [vmem:[%s1 + $0x48] sm:$0xf]
  %v232 = vld [vmem:[%s1 + $0x4c] sm:$0xf]
  %v233 = vld [vmem:[%s1 + $0x50] sm:$0xf]
  %v234 = vld [vmem:[%s1 + $0x54] sm:$0xf]
  %v235 = vld [vmem:[%s1 + $0x58] sm:$0xf]
  %v236 = vld [vmem:[%s1 + $0x5c] sm:$0xf]
  %v237 = vld [vmem:[%s1 + $0x60] sm:$0xf]
  %v238 = vld [vmem:[%s1 + $0x64] sm:$0xf]
  %v239 = vld [vmem:[%s1 + $0x68] sm:$0xf]
  %v240 = vld [vmem:[%s1 + $0x6c] sm:$0xf]
  %v241 = vld [vmem:[%s1 + $0x70] sm:$0xf]
  %v242 = vld [vmem:[%s1 + $0x74] sm:$0xf]
  %v243 = vld [vmem:[%s1 + $0x78] sm:$0xf]
  %v244 = vld [vmem:[%s1 + $0x7c] sm:$0xf]
  %v245 = vld [vmem:[%s1 + $0x80] sm:$0xf]
  %v246 = vld [vmem:[%s1 + $0x84] sm:$0xf]
  %v247 = vld [vmem:[%s1 + $0x88] sm:$0xf]
  %v248 = vld [vmem:[%s1 + $0x8c] sm:$0xf]
  %v249 = vld [vmem:[%s1 + $0x90] sm:$0xf]
  %v250 = vld [vmem:[%s1 + $0x94] sm:$0xf]
  %v251 = vld [vmem:[%s1 + $0x98] sm:$0xf]
  %v252 = vld [vmem:[%s1 + $0x9c] sm:$0xf]
  %v253 = vld [vmem:[%s1 + $0xa0] sm:$0xf]
  %v254 = vld [vmem:[%s1 + $0xa4] sm:$0xf]
  %v255 = vld [vmem:[%s1 + $0xa8] sm:$0xf]
  %v256 = vld [vmem:[%s1 + $0xac] sm:$0xf]
  %v257 = vld [vmem:[%s1 + $0xb0] sm:$0xf]
  %v258 = vld [vmem:[%s1 + $0xb4] sm:$0xf]
  %v259 = vld [vmem:[%s1 + $0xb8] sm:$0xf]
  %v260 = vld [vmem:[%s1 + $0xbc] sm:$0xf]
  %v261 = vld [vmem:[%s1 + $0xc0] sm:$0xf]
  %v262 = vld [vmem:[%s1 + $0xc4] sm:$0xf]
  %v263 = vld [vmem:[%s1 + $0xc8] sm:$0xf]
  %v264 = vld [vmem:[%s1 + $0xcc] sm:$0xf]
  %v265 = vld [vmem:[%s1 + $0xd0] sm:$0xf]
  %v266 = vld [vmem:[%s1 + $0xd4] sm:$0xf]
  %v267 = vld [vmem:[%s1 + $0xd8] sm:$0xf]
  %v268 = vld [vmem:[%s1 + $0xdc] sm:$0xf]
  %v269 = vld [vmem:[%s1 + $0xe0] sm:$0xf]
  %v270 = vld [vmem:[%s1 + $0xe4] sm:$0xf]
  %v271 = vld [vmem:[%s1 + $0xe8] sm:$0xf]
  %v272 = vld [vmem:[%s1 + $0xec] sm:$0xf]
  %v273 = vld [vmem:[%s1 + $0xf0] sm:$0xf]
  %v274 = vld [vmem:[%s1 + $0xf4] sm:$0xf]
  %v275 = vld [vmem:[%s1 + $0xf8] sm:$0xf]
  %v276 = vld [vmem:[%s1 + $0xfc] sm:$0xf]
  %v277 = vld [vmem:[%s1 + $0x100] sm:$0xf]
  %v278 = vld [vmem:[%s1 + $0x104] sm:$0xf]
  %v279 = vld [vmem:[%s1 + $0x108] sm:$0xf]
  %v280 = vld [vmem:[%s1 + $0x10c] sm:$0xf]
  %v281 = vld [vmem:[%s1 + $0x110] sm:$0xf]
  %v282 = vld [vmem:[%s1 + $0x114] sm:$0xf]
  %v283 = vld [vmem:[%s1 + $0x118] sm:$0xf]
  %v284 = vld [vmem:[%s1 + $0x11c] sm:$0xf]
  %v285 = vld [vmem:[%s1 + $0x120] sm:$0xf]
  %v286 = vld [vmem:[%s1 + $0x124] sm:$0xf]
  %v287 = vld [vmem:[%s1 + $0x128] sm:$0xf]
  %v288 = vld [vmem:[%s1 + $0x12c] sm:$0xf]
  %v289 = vld [vmem:[%s1 + $0x130] sm:$0xf]
  %v290 = vld [vmem:[%s1 + $0x134] sm:$0xf]
  %v291 = vld [vmem:[%s1 + $0x138] sm:$0xf]
  %v292 = vld [vmem:[%s1 + $0x13c] sm:$0xf]
  %v293 = vld [vmem:[%s1 + $0x140] sm:$0xf]
  %v294 = vld [vmem:[%s1 + $0x144] sm:$0xf]
  %v295 = vld [vmem:[%s1 + $0x148] sm:$0xf]
  %v296 = vld [vmem:[%s1 + $0x14c] sm:$0xf]
  %v297 = vld [vmem:[%s1 + $0x150] sm:$0xf]
  %v298 = vld [vmem:[%s1 + $0x154] sm:$0xf]
  %v299 = vld [vmem:[%s1 + $0x158] sm:$0xf]
  %v300 = vld [vmem:[%s1 + $0x15c] sm:$0xf]
  %v301 = vld [vmem:[%s1 + $0x160] sm:$0xf]
  %v302 = vld [vmem:[%s1 + $0x164] sm:$0xf]
  %v303 = vld [vmem:[%s1 + $0x168] sm:$0xf]
  %v304 = vld [vmem:[%s1 + $0x16c] sm:$0xf]
  %v305 = vld [vmem:[%s1 + $0x170] sm:$0xf]
  %v306 = vld [vmem:[%s1 + $0x174] sm:$0xf]
  %v307 = vld [vmem:[%s1 + $0x178] sm:$0xf]
  %v308 = vld [vmem:[%s1 + $0x17c] sm:$0xf]
  %v309 = vld [vmem:[%s1 + $0x180] sm:$0xf]
  %v310 = vld [vmem:[%s1 + $0x184] sm:$0xf]
  %v311 = vld [vmem:[%s1 + $0x188] sm:$0xf]
  %v312 = vld [vmem:[%s1 + $0x18c] sm:$0xf]
  %v313 = vld [vmem:[%s1 + $0x190] sm:$0xf]
  %v314 = vld [vmem:[%s1 + $0x194] sm:$0xf]
  %v315 = vld [vmem:[%s1 + $0x198] sm:$0xf]
  %v316 = vld [vmem:[%s1 + $0x19c] sm:$0xf]
  %v317 = vld [vmem:[%s1 + $0x1a0] sm:$0xf]
  %v318 = vld [vmem:[%s1 + $0x1a4] sm:$0xf]
  %v319 = vld [vmem:[%s1 + $0x1a8] sm:$0xf]
  %v320 = vld [vmem:[%s1 + $0x1ac] sm:$0xf]
  %v321 = vld [vmem:[%s1 + $0x1b0] sm:$0xf]
  %v322 = vld [vmem:[%s1 + $0x1b4] sm:$0xf]
  %v323 = vld [vmem:[%s1 + $0x1b8] sm:$0xf]
  %v324 = vld [vmem:[%s1 + $0x1bc] sm:$0xf]
  %v325 = vld [vmem:[%s1 + $0x1c0] sm:$0xf]
  %v326 = vld [vmem:[%s1 + $0x1c4] sm:$0xf]
  %v327 = vld [vmem:[%s1 + $0x1c8] sm:$0xf]
  %v328 = vld [vmem:[%s1 + $0x1cc] sm:$0xf]
  %v329 = vld [vmem:[%s1 + $0x1d0] sm:$0xf]
  %v330 = vld [vmem:[%s1 + $0x1d4] sm:$0xf]
  %v331 = vld [vmem:[%s1 + $0x1d8] sm:$0xf]
  %v332 = vld [vmem:[%s1 + $0x1dc] sm:$0xf]
  %v333 = vld [vmem:[%s1 + $0x1e0] sm:$0xf]
  %v334 = vld [vmem:[%s1 + $0x1e4] sm:$0xf]
  %v335 = vld [vmem:[%s1 + $0x1e8] sm:$0xf]
  %v336 = vld [vmem:[%s1 + $0x1ec] sm:$0xf]
  %v337 = vld [vmem:[%s1 + $0x1f0] sm:$0xf]
  %v338 = vld [vmem:[%s1 + $0x1f4] sm:$0xf]
  %v339 = vld [vmem:[%s1 + $0x1f8] sm:$0xf]
  %v340 = vld [vmem:[%s1 + $0x1fc] sm:$0xf]
  %v341 = vld [vmem:[%s2] sm:$0x1]
  %v343 = vperm.slane %v341, 0
  %v473 = vunpack.c.l.b16 %v213
  %v474 = vunpack.c.l.b16 %v214
  %v475 = vunpack.c.l.b16 %v215
  %v476 = vunpack.c.l.b16 %v216
  %v477 = vunpack.c.l.b16 %v217
  %v478 = vunpack.c.l.b16 %v218
  %v479 = vunpack.c.l.b16 %v219
  %v480 = vunpack.c.l.b16 %v220
  %v481 = vunpack.c.l.b16 %v221
  %v482 = vunpack.c.l.b16 %v222
  %v483 = vunpack.c.l.b16 %v223
  %v484 = vunpack.c.l.b16 %v224
  %v485 = vunpack.c.l.b16 %v225
  %v486 = vunpack.c.l.b16 %v226
  %v487 = vunpack.c.l.b16 %v227
  %v488 = vunpack.c.l.b16 %v228
  %v489 = vunpack.c.l.b16 %v229
  %v490 = vunpack.c.l.b16 %v230
  %v491 = vunpack.c.l.b16 %v231
  %v492 = vunpack.c.l.b16 %v232
  %v493 = vunpack.c.l.b16 %v233
  %v494 = vunpack.c.l.b16 %v234
  %v495 = vunpack.c.l.b16 %v235
  %v496 = vunpack.c.l.b16 %v236
  %v497 = vunpack.c.l.b16 %v237
  %v498 = vunpack.c.l.b16 %v238
  %v499 = vunpack.c.l.b16 %v239
  %v500 = vunpack.c.l.b16 %v240
  %v501 = vunpack.c.l.b16 %v241
  %v502 = vunpack.c.l.b16 %v242
  %v503 = vunpack.c.l.b16 %v243
  %v504 = vunpack.c.l.b16 %v244
  %v505 = vunpack.c.l.b16 %v245
  %v506 = vunpack.c.l.b16 %v246
  %v507 = vunpack.c.l.b16 %v247
  %v508 = vunpack.c.l.b16 %v248
  %v509 = vunpack.c.l.b16 %v249
  %v510 = vunpack.c.l.b16 %v250
  %v511 = vunpack.c.l.b16 %v251
  %v512 = vunpack.c.l.b16 %v252
  %v513 = vunpack.c.l.b16 %v253
  %v514 = vunpack.c.l.b16 %v254
  %v515 = vunpack.c.l.b16 %v255
  %v516 = vunpack.c.l.b16 %v256
  %v517 = vunpack.c.l.b16 %v257
  %v518 = vunpack.c.l.b16 %v258
  %v519 = vunpack.c.l.b16 %v259
  %v520 = vunpack.c.l.b16 %v260
  %v521 = vunpack.c.l.b16 %v261
  %v522 = vunpack.c.l.b16 %v262
  %v523 = vunpack.c.l.b16 %v263
  %v524 = vunpack.c.l.b16 %v264
  %v525 = vunpack.c.l.b16 %v265
  %v526 = vunpack.c.l.b16 %v266
  %v527 = vunpack.c.l.b16 %v267
  %v528 = vunpack.c.l.b16 %v268
  %v529 = vunpack.c.l.b16 %v269
  %v530 = vunpack.c.l.b16 %v270
  %v531 = vunpack.c.l.b16 %v271
  %v532 = vunpack.c.l.b16 %v272
  %v533 = vunpack.c.l.b16 %v273
  %v534 = vunpack.c.l.b16 %v274
  %v535 = vunpack.c.l.b16 %v275
  %v536 = vunpack.c.l.b16 %v276
  %v537 = vunpack.c.l.b16 %v277
  %v538 = vunpack.c.l.b16 %v278
  %v539 = vunpack.c.l.b16 %v279
  %v540 = vunpack.c.l.b16 %v280
  %v541 = vunpack.c.l.b16 %v281
  %v542 = vunpack.c.l.b16 %v282
  %v543 = vunpack.c.l.b16 %v283
  %v544 = vunpack.c.l.b16 %v284
  %v545 = vunpack.c.l.b16 %v285
  %v546 = vunpack.c.l.b16 %v286
  %v547 = vunpack.c.l.b16 %v287
  %v548 = vunpack.c.l.b16 %v288
  %v549 = vunpack.c.l.b16 %v289
  %v550 = vunpack.c.l.b16 %v290
  %v551 = vunpack.c.l.b16 %v291
  %v552 = vunpack.c.l.b16 %v292
  %v553 = vunpack.c.l.b16 %v293
  %v554 = vunpack.c.l.b16 %v294
  %v555 = vunpack.c.l.b16 %v295
  %v556 = vunpack.c.l.b16 %v296
  %v557 = vunpack.c.l.b16 %v297
  %v558 = vunpack.c.l.b16 %v298
  %v559 = vunpack.c.l.b16 %v299
  %v560 = vunpack.c.l.b16 %v300
  %v561 = vunpack.c.l.b16 %v301
  %v562 = vunpack.c.l.b16 %v302
  %v563 = vunpack.c.l.b16 %v303
  %v564 = vunpack.c.l.b16 %v304
  %v565 = vunpack.c.l.b16 %v305
  %v566 = vunpack.c.l.b16 %v306
  %v567 = vunpack.c.l.b16 %v307
  %v568 = vunpack.c.l.b16 %v308
  %v569 = vunpack.c.l.b16 %v309
  %v570 = vunpack.c.l.b16 %v310
  %v571 = vunpack.c.l.b16 %v311
  %v572 = vunpack.c.l.b16 %v312
  %v573 = vunpack.c.l.b16 %v313
  %v574 = vunpack.c.l.b16 %v314
  %v575 = vunpack.c.l.b16 %v315
  %v576 = vunpack.c.l.b16 %v316
  %v577 = vunpack.c.l.b16 %v317
  %v578 = vunpack.c.l.b16 %v318
  %v579 = vunpack.c.l.b16 %v319
  %v580 = vunpack.c.l.b16 %v320
  %v581 = vunpack.c.l.b16 %v321
  %v582 = vunpack.c.l.b16 %v322
  %v583 = vunpack.c.l.b16 %v323
  %v584 = vunpack.c.l.b16 %v324
  %v585 = vunpack.c.l.b16 %v325
  %v586 = vunpack.c.l.b16 %v326
  %v587 = vunpack.c.l.b16 %v327
  %v588 = vunpack.c.l.b16 %v328
  %v589 = vunpack.c.l.b16 %v329
  %v590 = vunpack.c.l.b16 %v330
  %v591 = vunpack.c.l.b16 %v331
  %v592 = vunpack.c.l.b16 %v332
  %v593 = vunpack.c.l.b16 %v333
  %v594 = vunpack.c.l.b16 %v334
  %v595 = vunpack.c.l.b16 %v335
  %v596 = vunpack.c.l.b16 %v336
  %v597 = vunpack.c.l.b16 %v337
  %v598 = vunpack.c.l.b16 %v338
  %v599 = vunpack.c.l.b16 %v339
  %v600 = vunpack.c.l.b16 %v340
  %v601 = vpack.c.b16 %v474, %v473
  %v602 = vpack.c.b16 %v476, %v475
  %v603 = vpack.c.b16 %v478, %v477
  %v604 = vpack.c.b16 %v480, %v479
  %v605 = vpack.c.b16 %v482, %v481
  %v606 = vpack.c.b16 %v484, %v483
  %v607 = vpack.c.b16 %v486, %v485
  %v608 = vpack.c.b16 %v488, %v487
  %v609 = vpack.c.b16 %v490, %v489
  %v610 = vpack.c.b16 %v492, %v491
  %v611 = vpack.c.b16 %v494, %v493
  %v612 = vpack.c.b16 %v496, %v495
  %v613 = vpack.c.b16 %v498, %v497
  %v614 = vpack.c.b16 %v500, %v499
  %v615 = vpack.c.b16 %v502, %v501
  %v616 = vpack.c.b16 %v504, %v503
  %v617 = vpack.c.b16 %v506, %v505
  %v618 = vpack.c.b16 %v508, %v507
  %v619 = vpack.c.b16 %v510, %v509
  %v620 = vpack.c.b16 %v512, %v511
  %v621 = vpack.c.b16 %v514, %v513
  %v622 = vpack.c.b16 %v516, %v515
  %v623 = vpack.c.b16 %v518, %v517
  %v624 = vpack.c.b16 %v520, %v519
  %v625 = vpack.c.b16 %v522, %v521
  %v626 = vpack.c.b16 %v524, %v523
  %v627 = vpack.c.b16 %v526, %v525
  %v628 = vpack.c.b16 %v528, %v527
  %v629 = vpack.c.b16 %v530, %v529
  %v630 = vpack.c.b16 %v532, %v531
  %v631 = vpack.c.b16 %v534, %v533
  %v632 = vpack.c.b16 %v536, %v535
  %v633 = vpack.c.b16 %v538, %v537
  %v634 = vpack.c.b16 %v540, %v539
  %v635 = vpack.c.b16 %v542, %v541
  %v636 = vpack.c.b16 %v544, %v543
  %v637 = vpack.c.b16 %v546, %v545
  %v638 = vpack.c.b16 %v548, %v547
  %v639 = vpack.c.b16 %v550, %v549
  %v640 = vpack.c.b16 %v552, %v551
  %v641 = vpack.c.b16 %v554, %v553
  %v642 = vpack.c.b16 %v556, %v555
  %v643 = vpack.c.b16 %v558, %v557
  %v644 = vpack.c.b16 %v560, %v559
  %v645 = vpack.c.b16 %v562, %v561
  %v646 = vpack.c.b16 %v564, %v563
  %v647 = vpack.c.b16 %v566, %v565
  %v648 = vpack.c.b16 %v568, %v567
  %v649 = vpack.c.b16 %v570, %v569
  %v650 = vpack.c.b16 %v572, %v571
  %v651 = vpack.c.b16 %v574, %v573
  %v652 = vpack.c.b16 %v576, %v575
  %v653 = vpack.c.b16 %v578, %v577
  %v654 = vpack.c.b16 %v580, %v579
  %v655 = vpack.c.b16 %v582, %v581
  %v656 = vpack.c.b16 %v584, %v583
  %v657 = vpack.c.b16 %v586, %v585
  %v658 = vpack.c.b16 %v588, %v587
  %v659 = vpack.c.b16 %v590, %v589
  %v660 = vpack.c.b16 %v592, %v591
  %v661 = vpack.c.b16 %v594, %v593
  %v662 = vpack.c.b16 %v596, %v595
  %v663 = vpack.c.b16 %v598, %v597
  %v664 = vpack.c.b16 %v600, %v599
  %729 = vmatpush.bf16.msra.mxu0 %v608
  %730 = vmatpush.bf16.msra.mxu0 %v607
  %731 = vmatpush.bf16.msra.mxu0 %v606
  %732 = vmatpush.bf16.msra.mxu0 %v605
  %733 = vmatpush.bf16.msra.mxu0 %v604
  %734 = vmatpush.bf16.msra.mxu0 %v603
  %735 = vmatpush.bf16.msra.mxu0 %v602
  %736 = vmatpush.bf16.msra.mxu0 %v601
  %737 = vmatmul.bf16.gmra.mxu0 %v149
  %v738 = vpop.f32.mrf.mxu0
  %v739 = vadd.f32 %v343, %v738
  %v740 = vpop.f32.mrf.mxu0
  %v741 = vadd.f32 %v343, %v740
  %742 = vmatmul.bf16.gmra.mxu0 %v157
  %v743 = vpop.f32.mrf.mxu0
  %v744 = vadd.f32 %v343, %v743
  %v745 = vpop.f32.mrf.mxu0
  %v746 = vadd.f32 %v343, %v745
  %747 = vmatmul.bf16.gmra.mxu0 %v165
  %v748 = vpop.f32.mrf.mxu0
  %v749 = vadd.f32 %v343, %v748
  %v750 = vpop.f32.mrf.mxu0
  %v751 = vadd.f32 %v343, %v750
  %752 = vmatmul.bf16.gmra.mxu0 %v173
  %v753 = vpop.f32.mrf.mxu0
  %v754 = vadd.f32 %v343, %v753
  %v755 = vpop.f32.mrf.mxu0
  %v756 = vadd.f32 %v343, %v755
  %757 = vmatmul.bf16.gmra.mxu0 %v181
  %v758 = vpop.f32.mrf.mxu0
  %v759 = vadd.f32 %v343, %v758
  %v760 = vpop.f32.mrf.mxu0
  %v761 = vadd.f32 %v343, %v760
  %762 = vmatmul.bf16.gmra.mxu0 %v189
  %v763 = vpop.f32.mrf.mxu0
  %v764 = vadd.f32 %v343, %v763
  %v765 = vpop.f32.mrf.mxu0
  %v766 = vadd.f32 %v343, %v765
  %767 = vmatmul.bf16.gmra.mxu0 %v197
  %v768 = vpop.f32.mrf.mxu0
  %v769 = vadd.f32 %v343, %v768
  %v770 = vpop.f32.mrf.mxu0
  %v771 = vadd.f32 %v343, %v770
  %772 = vmatmul.bf16.gmra.mxu0 %v205
  %v773 = vpop.f32.mrf.mxu0
  %v774 = vadd.f32 %v343, %v773
  %v775 = vpop.f32.mrf.mxu0
  %v776 = vadd.f32 %v343, %v775
  %777 = vdwg.mxu0
  %778 = vmatpush.bf16.msra.mxu0 %v616
  %779 = vmatpush.bf16.msra.mxu0 %v615
  %780 = vmatpush.bf16.msra.mxu0 %v614
  %781 = vmatpush.bf16.msra.mxu0 %v613
  %782 = vmatpush.bf16.msra.mxu0 %v612
  %783 = vmatpush.bf16.msra.mxu0 %v611
  %784 = vmatpush.bf16.msra.mxu0 %v610
  %785 = vmatpush.bf16.msra.mxu0 %v609
  %786 = vmatmul.bf16.gmra.mxu0 %v150
  %v787 = vpop.f32.mrf.mxu0
  %v788 = vadd.f32 %v739, %v787
  %v789 = vpop.f32.mrf.mxu0
  %v790 = vadd.f32 %v741, %v789
  %791 = vmatmul.bf16.gmra.mxu0 %v158
  %v792 = vpop.f32.mrf.mxu0
  %v793 = vadd.f32 %v744, %v792
  %v794 = vpop.f32.mrf.mxu0
  %v795 = vadd.f32 %v746, %v794
  %796 = vmatmul.bf16.gmra.mxu0 %v166
  %v797 = vpop.f32.mrf.mxu0
  %v798 = vadd.f32 %v749, %v797
  %v799 = vpop.f32.mrf.mxu0
  %v800 = vadd.f32 %v751, %v799
  %801 = vmatmul.bf16.gmra.mxu0 %v174
  %v802 = vpop.f32.mrf.mxu0
  %v803 = vadd.f32 %v754, %v802
  %v804 = vpop.f32.mrf.mxu0
  %v805 = vadd.f32 %v756, %v804
  %806 = vmatmul.bf16.gmra.mxu0 %v182
  %v807 = vpop.f32.mrf.mxu0
  %v808 = vadd.f32 %v759, %v807
  %v809 = vpop.f32.mrf.mxu0
  %v810 = vadd.f32 %v761, %v809
  %811 = vmatmul.bf16.gmra.mxu0 %v190
  %v812 = vpop.f32.mrf.mxu0
  %v813 = vadd.f32 %v764, %v812
  %v814 = vpop.f32.mrf.mxu0
  %v815 = vadd.f32 %v766, %v814
  %816 = vmatmul.bf16.gmra.mxu0 %v198
  %v817 = vpop.f32.mrf.mxu0
  %v818 = vadd.f32 %v769, %v817
  %v819 = vpop.f32.mrf.mxu0
  %v820 = vadd.f32 %v771, %v819
  %821 = vmatmul.bf16.gmra.mxu0 %v206
  %v822 = vpop.f32.mrf.mxu0
  %v823 = vadd.f32 %v774, %v822
  %v824 = vpop.f32.mrf.mxu0
  %v825 = vadd.f32 %v776, %v824
  %826 = vdwg.mxu0
  %827 = vmatpush.bf16.msra.mxu0 %v624
  %828 = vmatpush.bf16.msra.mxu0 %v623
  %829 = vmatpush.bf16.msra.mxu0 %v622
  %830 = vmatpush.bf16.msra.mxu0 %v621
  %831 = vmatpush.bf16.msra.mxu0 %v620
  %832 = vmatpush.bf16.msra.mxu0 %v619
  %833 = vmatpush.bf16.msra.mxu0 %v618
  %834 = vmatpush.bf16.msra.mxu0 %v617
  %835 = vmatmul.bf16.gmra.mxu0 %v151
  %v836 = vpop.f32.mrf.mxu0
  %v837 = vadd.f32 %v788, %v836
  %v838 = vpop.f32.mrf.mxu0
  %v839 = vadd.f32 %v790, %v838
  %840 = vmatmul.bf16.gmra.mxu0 %v159
  %v841 = vpop.f32.mrf.mxu0
  %v842 = vadd.f32 %v793, %v841
  %v843 = vpop.f32.mrf.mxu0
  %v844 = vadd.f32 %v795, %v843
  %845 = vmatmul.bf16.gmra.mxu0 %v167
  %v846 = vpop.f32.mrf.mxu0
  %v847 = vadd.f32 %v798, %v846
  %v848 = vpop.f32.mrf.mxu0
  %v849 = vadd.f32 %v800, %v848
  %850 = vmatmul.bf16.gmra.mxu0 %v175
  %v851 = vpop.f32.mrf.mxu0
  %v852 = vadd.f32 %v803, %v851
  %v853 = vpop.f32.mrf.mxu0
  %v854 = vadd.f32 %v805, %v853
  %855 = vmatmul.bf16.gmra.mxu0 %v183
  %v856 = vpop.f32.mrf.mxu0
  %v857 = vadd.f32 %v808, %v856
  %v858 = vpop.f32.mrf.mxu0
  %v859 = vadd.f32 %v810, %v858
  %860 = vmatmul.bf16.gmra.mxu0 %v191
  %v861 = vpop.f32.mrf.mxu0
  %v862 = vadd.f32 %v813, %v861
  %v863 = vpop.f32.mrf.mxu0
  %v864 = vadd.f32 %v815, %v863
  %865 = vmatmul.bf16.gmra.mxu0 %v199
  %v866 = vpop.f32.mrf.mxu0
  %v867 = vadd.f32 %v818, %v866
  %v868 = vpop.f32.mrf.mxu0
  %v869 = vadd.f32 %v820, %v868
  %870 = vmatmul.bf16.gmra.mxu0 %v207
  %v871 = vpop.f32.mrf.mxu0
  %v872 = vadd.f32 %v823, %v871
  %v873 = vpop.f32.mrf.mxu0
  %v874 = vadd.f32 %v825, %v873
  %875 = vdwg.mxu0
  %876 = vmatpush.bf16.msra.mxu0 %v632
  %877 = vmatpush.bf16.msra.mxu0 %v631
  %878 = vmatpush.bf16.msra.mxu0 %v630
  %879 = vmatpush.bf16.msra.mxu0 %v629
  %880 = vmatpush.bf16.msra.mxu0 %v628
  %881 = vmatpush.bf16.msra.mxu0 %v627
  %882 = vmatpush.bf16.msra.mxu0 %v626
  %883 = vmatpush.bf16.msra.mxu0 %v625
  %884 = vmatmul.bf16.gmra.mxu0 %v152
  %v885 = vpop.f32.mrf.mxu0
  %v886 = vadd.f32 %v837, %v885
  %v887 = vpop.f32.mrf.mxu0
  %v888 = vadd.f32 %v839, %v887
  %889 = vmatmul.bf16.gmra.mxu0 %v160
  %v890 = vpop.f32.mrf.mxu0
  %v891 = vadd.f32 %v842, %v890
  %v892 = vpop.f32.mrf.mxu0
  %v893 = vadd.f32 %v844, %v892
  %894 = vmatmul.bf16.gmra.mxu0 %v168
  %v895 = vpop.f32.mrf.mxu0
  %v896 = vadd.f32 %v847, %v895
  %v897 = vpop.f32.mrf.mxu0
  %v898 = vadd.f32 %v849, %v897
  %899 = vmatmul.bf16.gmra.mxu0 %v176
  %v900 = vpop.f32.mrf.mxu0
  %v901 = vadd.f32 %v852, %v900
  %v902 = vpop.f32.mrf.mxu0
  %v903 = vadd.f32 %v854, %v902
  %904 = vmatmul.bf16.gmra.mxu0 %v184
  %v905 = vpop.f32.mrf.mxu0
  %v906 = vadd.f32 %v857, %v905
  %v907 = vpop.f32.mrf.mxu0
  %v908 = vadd.f32 %v859, %v907
  %909 = vmatmul.bf16.gmra.mxu0 %v192
  %v910 = vpop.f32.mrf.mxu0
  %v911 = vadd.f32 %v862, %v910
  %v912 = vpop.f32.mrf.mxu0
  %v913 = vadd.f32 %v864, %v912
  %914 = vmatmul.bf16.gmra.mxu0 %v200
  %v915 = vpop.f32.mrf.mxu0
  %v916 = vadd.f32 %v867, %v915
  %v917 = vpop.f32.mrf.mxu0
  %v918 = vadd.f32 %v869, %v917
  %919 = vmatmul.bf16.gmra.mxu0 %v208
  %v920 = vpop.f32.mrf.mxu0
  %v921 = vadd.f32 %v872, %v920
  %v922 = vpop.f32.mrf.mxu0
  %v923 = vadd.f32 %v874, %v922
  %924 = vdwg.mxu0
  %925 = vmatpush.bf16.msra.mxu0 %v640
  %926 = vmatpush.bf16.msra.mxu0 %v639
  %927 = vmatpush.bf16.msra.mxu0 %v638
  %928 = vmatpush.bf16.msra.mxu0 %v637
  %929 = vmatpush.bf16.msra.mxu0 %v636
  %930 = vmatpush.bf16.msra.mxu0 %v635
  %931 = vmatpush.bf16.msra.mxu0 %v634
  %932 = vmatpush.bf16.msra.mxu0 %v633
  %933 = vmatmul.bf16.gmra.mxu0 %v153
  %v934 = vpop.f32.mrf.mxu0
  %v935 = vadd.f32 %v886, %v934
  %v936 = vpop.f32.mrf.mxu0
  %v937 = vadd.f32 %v888, %v936
  %938 = vmatmul.bf16.gmra.mxu0 %v161
  %v939 = vpop.f32.mrf.mxu0
  %v940 = vadd.f32 %v891, %v939
  %v941 = vpop.f32.mrf.mxu0
  %v942 = vadd.f32 %v893, %v941
  %943 = vmatmul.bf16.gmra.mxu0 %v169
  %v944 = vpop.f32.mrf.mxu0
  %v945 = vadd.f32 %v896, %v944
  %v946 = vpop.f32.mrf.mxu0
  %v947 = vadd.f32 %v898, %v946
  %948 = vmatmul.bf16.gmra.mxu0 %v177
  %v949 = vpop.f32.mrf.mxu0
  %v950 = vadd.f32 %v901, %v949
  %v951 = vpop.f32.mrf.mxu0
  %v952 = vadd.f32 %v903, %v951
  %953 = vmatmul.bf16.gmra.mxu0 %v185
  %v954 = vpop.f32.mrf.mxu0
  %v955 = vadd.f32 %v906, %v954
  %v956 = vpop.f32.mrf.mxu0
  %v957 = vadd.f32 %v908, %v956
  %958 = vmatmul.bf16.gmra.mxu0 %v193
  %v959 = vpop.f32.mrf.mxu0
  %v960 = vadd.f32 %v911, %v959
  %v961 = vpop.f32.mrf.mxu0
  %v962 = vadd.f32 %v913, %v961
  %963 = vmatmul.bf16.gmra.mxu0 %v201
  %v964 = vpop.f32.mrf.mxu0
  %v965 = vadd.f32 %v916, %v964
  %v966 = vpop.f32.mrf.mxu0
  %v967 = vadd.f32 %v918, %v966
  %968 = vmatmul.bf16.gmra.mxu0 %v209
  %v969 = vpop.f32.mrf.mxu0
  %v970 = vadd.f32 %v921, %v969
  %v971 = vpop.f32.mrf.mxu0
  %v972 = vadd.f32 %v923, %v971
  %973 = vdwg.mxu0
  %974 = vmatpush.bf16.msra.mxu0 %v648
  %975 = vmatpush.bf16.msra.mxu0 %v647
  %976 = vmatpush.bf16.msra.mxu0 %v646
  %977 = vmatpush.bf16.msra.mxu0 %v645
  %978 = vmatpush.bf16.msra.mxu0 %v644
  %979 = vmatpush.bf16.msra.mxu0 %v643
  %980 = vmatpush.bf16.msra.mxu0 %v642
  %981 = vmatpush.bf16.msra.mxu0 %v641
  %982 = vmatmul.bf16.gmra.mxu0 %v154
  %v983 = vpop.f32.mrf.mxu0
  %v984 = vadd.f32 %v935, %v983
  %v985 = vpop.f32.mrf.mxu0
  %v986 = vadd.f32 %v937, %v985
  %987 = vmatmul.bf16.gmra.mxu0 %v162
  %v988 = vpop.f32.mrf.mxu0
  %v989 = vadd.f32 %v940, %v988
  %v990 = vpop.f32.mrf.mxu0
  %v991 = vadd.f32 %v942, %v990
  %992 = vmatmul.bf16.gmra.mxu0 %v170
  %v993 = vpop.f32.mrf.mxu0
  %v994 = vadd.f32 %v945, %v993
  %v995 = vpop.f32.mrf.mxu0
  %v996 = vadd.f32 %v947, %v995
  %997 = vmatmul.bf16.gmra.mxu0 %v178
  %v998 = vpop.f32.mrf.mxu0
  %v999 = vadd.f32 %v950, %v998
  %v1000 = vpop.f32.mrf.mxu0
  %v1001 = vadd.f32 %v952, %v1000
  %1002 = vmatmul.bf16.gmra.mxu0 %v186
  %v1003 = vpop.f32.mrf.mxu0
  %v1004 = vadd.f32 %v955, %v1003
  %v1005 = vpop.f32.mrf.mxu0
  %v1006 = vadd.f32 %v957, %v1005
  %1007 = vmatmul.bf16.gmra.mxu0 %v194
  %v1008 = vpop.f32.mrf.mxu0
  %v1009 = vadd.f32 %v960, %v1008
  %v1010 = vpop.f32.mrf.mxu0
  %v1011 = vadd.f32 %v962, %v1010
  %1012 = vmatmul.bf16.gmra.mxu0 %v202
  %v1013 = vpop.f32.mrf.mxu0
  %v1014 = vadd.f32 %v965, %v1013
  %v1015 = vpop.f32.mrf.mxu0
  %v1016 = vadd.f32 %v967, %v1015
  %1017 = vmatmul.bf16.gmra.mxu0 %v210
  %v1018 = vpop.f32.mrf.mxu0
  %v1019 = vadd.f32 %v970, %v1018
  %v1020 = vpop.f32.mrf.mxu0
  %v1021 = vadd.f32 %v972, %v1020
  %1022 = vdwg.mxu0
  %1023 = vmatpush.bf16.msra.mxu0 %v656
  %1024 = vmatpush.bf16.msra.mxu0 %v655
  %1025 = vmatpush.bf16.msra.mxu0 %v654
  %1026 = vmatpush.bf16.msra.mxu0 %v653
  %1027 = vmatpush.bf16.msra.mxu0 %v652
  %1028 = vmatpush.bf16.msra.mxu0 %v651
  %1029 = vmatpush.bf16.msra.mxu0 %v650
  %1030 = vmatpush.bf16.msra.mxu0 %v649
  %1031 = vmatmul.bf16.gmra.mxu0 %v155
  %v1032 = vpop.f32.mrf.mxu0
  %v1033 = vadd.f32 %v984, %v1032
  %v1034 = vpop.f32.mrf.mxu0
  %v1035 = vadd.f32 %v986, %v1034
  %1036 = vmatmul.bf16.gmra.mxu0 %v163
  %v1037 = vpop.f32.mrf.mxu0
  %v1038 = vadd.f32 %v989, %v1037
  %v1039 = vpop.f32.mrf.mxu0
  %v1040 = vadd.f32 %v991, %v1039
  %1041 = vmatmul.bf16.gmra.mxu0 %v171
  %v1042 = vpop.f32.mrf.mxu0
  %v1043 = vadd.f32 %v994, %v1042
  %v1044 = vpop.f32.mrf.mxu0
  %v1045 = vadd.f32 %v996, %v1044
  %1046 = vmatmul.bf16.gmra.mxu0 %v179
  %v1047 = vpop.f32.mrf.mxu0
  %v1048 = vadd.f32 %v999, %v1047
  %v1049 = vpop.f32.mrf.mxu0
  %v1050 = vadd.f32 %v1001, %v1049
  %1051 = vmatmul.bf16.gmra.mxu0 %v187
  %v1052 = vpop.f32.mrf.mxu0
  %v1053 = vadd.f32 %v1004, %v1052
  %v1054 = vpop.f32.mrf.mxu0
  %v1055 = vadd.f32 %v1006, %v1054
  %1056 = vmatmul.bf16.gmra.mxu0 %v195
  %v1057 = vpop.f32.mrf.mxu0
  %v1058 = vadd.f32 %v1009, %v1057
  %v1059 = vpop.f32.mrf.mxu0
  %v1060 = vadd.f32 %v1011, %v1059
  %1061 = vmatmul.bf16.gmra.mxu0 %v203
  %v1062 = vpop.f32.mrf.mxu0
  %v1063 = vadd.f32 %v1014, %v1062
  %v1064 = vpop.f32.mrf.mxu0
  %v1065 = vadd.f32 %v1016, %v1064
  %1066 = vmatmul.bf16.gmra.mxu0 %v211
  %v1067 = vpop.f32.mrf.mxu0
  %v1068 = vadd.f32 %v1019, %v1067
  %v1069 = vpop.f32.mrf.mxu0
  %v1070 = vadd.f32 %v1021, %v1069
  %1071 = vdwg.mxu0
  %1072 = vmatpush.bf16.msra.mxu0 %v664
  %1073 = vmatpush.bf16.msra.mxu0 %v663
  %1074 = vmatpush.bf16.msra.mxu0 %v662
  %1075 = vmatpush.bf16.msra.mxu0 %v661
  %1076 = vmatpush.bf16.msra.mxu0 %v660
  %1077 = vmatpush.bf16.msra.mxu0 %v659
  %1078 = vmatpush.bf16.msra.mxu0 %v658
  %1079 = vmatpush.bf16.msra.mxu0 %v657
  %1080 = vmatmul.bf16.gmra.mxu0 %v156
  %v1081 = vpop.f32.mrf.mxu0
  %v1082 = vadd.f32 %v1033, %v1081
  %v1083 = vpop.f32.mrf.mxu0
  %v1084 = vadd.f32 %v1035, %v1083
  %1085 = vmatmul.bf16.gmra.mxu0 %v164
  %v1086 = vpop.f32.mrf.mxu0
  %v1087 = vadd.f32 %v1038, %v1086
  %v1088 = vpop.f32.mrf.mxu0
  %v1089 = vadd.f32 %v1040, %v1088
  %1090 = vmatmul.bf16.gmra.mxu0 %v172
  %v1091 = vpop.f32.mrf.mxu0
  %v1092 = vadd.f32 %v1043, %v1091
  %v1093 = vpop.f32.mrf.mxu0
  %v1094 = vadd.f32 %v1045, %v1093
  %1095 = vmatmul.bf16.gmra.mxu0 %v180
  %v1096 = vpop.f32.mrf.mxu0
  %v1097 = vadd.f32 %v1048, %v1096
  %v1098 = vpop.f32.mrf.mxu0
  %v1099 = vadd.f32 %v1050, %v1098
  %1100 = vmatmul.bf16.gmra.mxu0 %v188
  %v1101 = vpop.f32.mrf.mxu0
  %v1102 = vadd.f32 %v1053, %v1101
  %v1103 = vpop.f32.mrf.mxu0
  %v1104 = vadd.f32 %v1055, %v1103
  %1105 = vmatmul.bf16.gmra.mxu0 %v196
  %v1106 = vpop.f32.mrf.mxu0
  %v1107 = vadd.f32 %v1058, %v1106
  %v1108 = vpop.f32.mrf.mxu0
  %v1109 = vadd.f32 %v1060, %v1108
  %1110 = vmatmul.bf16.gmra.mxu0 %v204
  %v1111 = vpop.f32.mrf.mxu0
  %v1112 = vadd.f32 %v1063, %v1111
  %v1113 = vpop.f32.mrf.mxu0
  %v1114 = vadd.f32 %v1065, %v1113
  %1115 = vmatmul.bf16.gmra.mxu0 %v212
  %v1116 = vpop.f32.mrf.mxu0
  %v1117 = vadd.f32 %v1068, %v1116
  %v1118 = vpop.f32.mrf.mxu0
  %v1119 = vadd.f32 %v1070, %v1118
  %1120 = vdwg.mxu0
  %v1121 = vmax.f32 %v1082, 0.0
  %v1122 = vmax.f32 %v1084, 0.0
  %v1123 = vmax.f32 %v1087, 0.0
  %v1124 = vmax.f32 %v1089, 0.0
  %v1125 = vmax.f32 %v1092, 0.0
  %v1126 = vmax.f32 %v1094, 0.0
  %v1127 = vmax.f32 %v1097, 0.0
  %v1128 = vmax.f32 %v1099, 0.0
  %v1129 = vmax.f32 %v1102, 0.0
  %v1130 = vmax.f32 %v1104, 0.0
  %v1131 = vmax.f32 %v1107, 0.0
  %v1132 = vmax.f32 %v1109, 0.0
  %v1133 = vmax.f32 %v1112, 0.0
  %v1134 = vmax.f32 %v1114, 0.0
  %v1135 = vmax.f32 %v1117, 0.0
  %v1136 = vmax.f32 %v1119, 0.0
  %v1137 = vpack.c.bf16 %v1122, %v1121
  %v1138 = vpack.c.bf16 %v1124, %v1123
  %v1139 = vpack.c.bf16 %v1126, %v1125
  %v1140 = vpack.c.bf16 %v1128, %v1127
  %v1141 = vpack.c.bf16 %v1130, %v1129
  %v1142 = vpack.c.bf16 %v1132, %v1131
  %v1143 = vpack.c.bf16 %v1134, %v1133
  %v1144 = vpack.c.bf16 %v1136, %v1135
  %v1145 = vld [vmem:[%s3] sm:$0xf]
  %v1146 = vld [vmem:[%s3 + $0x4] sm:$0xf]
  %v1147 = vld [vmem:[%s3 + $0x8] sm:$0xf]
  %v1148 = vld [vmem:[%s3 + $0xc] sm:$0xf]
  %v1149 = vld [vmem:[%s3 + $0x10] sm:$0xf]
  %v1150 = vld [vmem:[%s3 + $0x14] sm:$0xf]
  %v1151 = vld [vmem:[%s3 + $0x18] sm:$0xf]
  %v1152 = vld [vmem:[%s3 + $0x1c] sm:$0xf]
  %v1153 = vld [vmem:[%s4] sm:$0x1]
  %v1155 = vperm.slane %v1153, 0
  %v1165 = vunpack.c.l.b16 %v1145
  %v1166 = vunpack.c.l.b16 %v1146
  %v1167 = vunpack.c.l.b16 %v1147
  %v1168 = vunpack.c.l.b16 %v1148
  %v1169 = vunpack.c.l.b16 %v1149
  %v1170 = vunpack.c.l.b16 %v1150
  %v1171 = vunpack.c.l.b16 %v1151
  %v1172 = vunpack.c.l.b16 %v1152
  %v1173 = vpack.c.b16 %v1166, %v1165
  %v1174 = vpack.c.b16 %v1168, %v1167
  %v1175 = vpack.c.b16 %v1170, %v1169
  %v1176 = vpack.c.b16 %v1172, %v1171
  %vm1181 = vcmask 523264
  %v1183 = vsel %vm1181, %v1137, 0
  %v1186 = vsel %vm1181, %v1138, 0
  %v1189 = vsel %vm1181, %v1139, 0
  %v1192 = vsel %vm1181, %v1140, 0
  %v1195 = vsel %vm1181, %v1141, 0
  %v1198 = vsel %vm1181, %v1142, 0
  %v1201 = vsel %vm1181, %v1143, 0
  %v1204 = vsel %vm1181, %v1144, 0
  %1206 = vmatpush.bf16.msra.mxu0 0
  %1207 = vmatpush.bf16.msra.mxu0 0
  %1208 = vmatpush.bf16.msra.mxu0 0
  %1209 = vmatpush.bf16.msra.mxu0 0
  %1210 = vmatpush.bf16.msra.mxu0 %v1176
  %1211 = vmatpush.bf16.msra.mxu0 %v1175
  %1212 = vmatpush.bf16.msra.mxu0 %v1174
  %1213 = vmatpush.bf16.msra.mxu0 %v1173
  %1214 = vmatmul.bf16.gmra.mxu0 %v1183
  %v1215 = vpop.f32.mrf.mxu0
  %v1216 = vadd.f32 %v1155, %v1215
  %v1217 = vpop.f32.mrf.mxu0
  %v1218 = vadd.f32 %v1155, %v1217
  %1219 = vmatmul.bf16.gmra.mxu0 %v1186
  %v1220 = vpop.f32.mrf.mxu0
  %v1221 = vadd.f32 %v1155, %v1220
  %v1222 = vpop.f32.mrf.mxu0
  %v1223 = vadd.f32 %v1155, %v1222
  %1224 = vmatmul.bf16.gmra.mxu0 %v1189
  %v1225 = vpop.f32.mrf.mxu0
  %v1226 = vadd.f32 %v1155, %v1225
  %v1227 = vpop.f32.mrf.mxu0
  %v1228 = vadd.f32 %v1155, %v1227
  %1229 = vmatmul.bf16.gmra.mxu0 %v1192
  %v1230 = vpop.f32.mrf.mxu0
  %v1231 = vadd.f32 %v1155, %v1230
  %v1232 = vpop.f32.mrf.mxu0
  %v1233 = vadd.f32 %v1155, %v1232
  %1234 = vmatmul.bf16.gmra.mxu0 %v1195
  %v1235 = vpop.f32.mrf.mxu0
  %v1236 = vadd.f32 %v1155, %v1235
  %v1237 = vpop.f32.mrf.mxu0
  %v1238 = vadd.f32 %v1155, %v1237
  %1239 = vmatmul.bf16.gmra.mxu0 %v1198
  %v1240 = vpop.f32.mrf.mxu0
  %v1241 = vadd.f32 %v1155, %v1240
  %v1242 = vpop.f32.mrf.mxu0
  %v1243 = vadd.f32 %v1155, %v1242
  %1244 = vmatmul.bf16.gmra.mxu0 %v1201
  %v1245 = vpop.f32.mrf.mxu0
  %v1246 = vadd.f32 %v1155, %v1245
  %v1247 = vpop.f32.mrf.mxu0
  %v1248 = vadd.f32 %v1155, %v1247
  %1249 = vmatmul.bf16.gmra.mxu0 %v1204
  %v1250 = vpop.f32.mrf.mxu0
  %v1251 = vadd.f32 %v1155, %v1250
  %v1252 = vpop.f32.mrf.mxu0
  %v1253 = vadd.f32 %v1155, %v1252
  %1254 = vdwg.mxu0
  %v1255 = vlaneseq
  %v1256 = vand.u32 %v1255, 127
  %vm1257 = vcmask 48128
  %v1258 = vsel %vm1257, %v1216, -inf
  %1259 = vmax.xlane.f32.xlu0 %v1258
  %v1260 = vpop.xlane.xlu0 %1259
  %v1261 = vsel %vm1257, %v1218, -inf
  %1262 = vmax.xlane.f32.xlu0 %v1261
  %v1263 = vpop.xlane.xlu0 %1262
  %v1264 = vsel %vm1257, %v1221, -inf
  %1265 = vmax.xlane.f32.xlu0 %v1264
  %v1266 = vpop.xlane.xlu0 %1265
  %v1267 = vsel %vm1257, %v1223, -inf
  %1268 = vmax.xlane.f32.xlu0 %v1267
  %v1269 = vpop.xlane.xlu0 %1268
  %v1270 = vsel %vm1257, %v1226, -inf
  %1271 = vmax.xlane.f32.xlu0 %v1270
  %v1272 = vpop.xlane.xlu0 %1271
  %v1273 = vsel %vm1257, %v1228, -inf
  %1274 = vmax.xlane.f32.xlu0 %v1273
  %v1275 = vpop.xlane.xlu0 %1274
  %v1276 = vsel %vm1257, %v1231, -inf
  %1277 = vmax.xlane.f32.xlu0 %v1276
  %v1278 = vpop.xlane.xlu0 %1277
  %v1279 = vsel %vm1257, %v1233, -inf
  %1280 = vmax.xlane.f32.xlu0 %v1279
  %v1281 = vpop.xlane.xlu0 %1280
  %v1282 = vsel %vm1257, %v1236, -inf
  %1283 = vmax.xlane.f32.xlu0 %v1282
  %v1284 = vpop.xlane.xlu0 %1283
  %v1285 = vsel %vm1257, %v1238, -inf
  %1286 = vmax.xlane.f32.xlu0 %v1285
  %v1287 = vpop.xlane.xlu0 %1286
  %v1288 = vsel %vm1257, %v1241, -inf
  %1289 = vmax.xlane.f32.xlu0 %v1288
  %v1290 = vpop.xlane.xlu0 %1289
  %v1291 = vsel %vm1257, %v1243, -inf
  %1292 = vmax.xlane.f32.xlu0 %v1291
  %v1293 = vpop.xlane.xlu0 %1292
  %v1294 = vsel %vm1257, %v1246, -inf
  %1295 = vmax.xlane.f32.xlu0 %v1294
  %v1296 = vpop.xlane.xlu0 %1295
  %v1297 = vsel %vm1257, %v1248, -inf
  %1298 = vmax.xlane.f32.xlu0 %v1297
  %v1299 = vpop.xlane.xlu0 %1298
  %v1300 = vsel %vm1257, %v1251, -inf
  %1301 = vmax.xlane.f32.xlu0 %v1300
  %v1302 = vpop.xlane.xlu0 %1301
  %v1303 = vsel %vm1257, %v1253, -inf
  %1304 = vmax.xlane.f32.xlu0 %v1303
  %v1305 = vpop.xlane.xlu0 %1304
  %vm1306 = vcmp.eq.f32.partialorder %v1216, %v1260
  %vm1307 = vcmp.eq.f32.partialorder %v1218, %v1263
  %vm1308 = vcmp.eq.f32.partialorder %v1221, %v1266
  %vm1309 = vcmp.eq.f32.partialorder %v1223, %v1269
  %vm1310 = vcmp.eq.f32.partialorder %v1226, %v1272
  %vm1311 = vcmp.eq.f32.partialorder %v1228, %v1275
  %vm1312 = vcmp.eq.f32.partialorder %v1231, %v1278
  %vm1313 = vcmp.eq.f32.partialorder %v1233, %v1281
  %vm1314 = vcmp.eq.f32.partialorder %v1236, %v1284
  %vm1315 = vcmp.eq.f32.partialorder %v1238, %v1287
  %vm1316 = vcmp.eq.f32.partialorder %v1241, %v1290
  %vm1317 = vcmp.eq.f32.partialorder %v1243, %v1293
  %vm1318 = vcmp.eq.f32.partialorder %v1246, %v1296
  %vm1319 = vcmp.eq.f32.partialorder %v1248, %v1299
  %vm1320 = vcmp.eq.f32.partialorder %v1251, %v1302
  %vm1321 = vcmp.eq.f32.partialorder %v1253, %v1305
  %v1322 = vsel %vm1306, %v1256, 6
  %v1323 = vsel %vm1307, %v1256, 6
  %v1324 = vsel %vm1308, %v1256, 6
  %v1325 = vsel %vm1309, %v1256, 6
  %v1326 = vsel %vm1310, %v1256, 6
  %v1327 = vsel %vm1311, %v1256, 6
  %v1328 = vsel %vm1312, %v1256, 6
  %v1329 = vsel %vm1313, %v1256, 6
  %v1330 = vsel %vm1314, %v1256, 6
  %v1331 = vsel %vm1315, %v1256, 6
  %v1332 = vsel %vm1316, %v1256, 6
  %v1333 = vsel %vm1317, %v1256, 6
  %v1334 = vsel %vm1318, %v1256, 6
  %v1335 = vsel %vm1319, %v1256, 6
  %v1336 = vsel %vm1320, %v1256, 6
  %v1337 = vsel %vm1321, %v1256, 6
  %v1338 = vsel %vm1257, %v1322, 2147483647
  %v1339 = vand.u32 %v1338, 65535
  %v1340 = vshra.s32 %v1338, 16
  %v1341 = vcvt.s32.f32 %v1339
  %v1342 = vcvt.s32.f32 %v1340
  %1343 = vmin.xlane.f32.xlu0 %v1342
  %v1344 = vpop.xlane.xlu0 %1343
  %vm1345 = vcmp.eq.f32.partialorder %v1342, %v1344
  %v1346 = vsel %vm1345, %v1341, inf
  %1347 = vmin.xlane.f32.xlu0 %v1346
  %v1348 = vpop.xlane.xlu0 %1347
  %v1349 = vcvt.f32.s32 %v1348
  %v1350 = vcvt.f32.s32 %v1344
  %v1351 = vshll.u32 %v1350, 16
  %v1352 = vadd.s32 %v1351, %v1349
  %v1353 = vsel %vm1257, %v1323, 2147483647
  %v1354 = vand.u32 %v1353, 65535
  %v1355 = vshra.s32 %v1353, 16
  %v1356 = vcvt.s32.f32 %v1354
  %v1357 = vcvt.s32.f32 %v1355
  %1358 = vmin.xlane.f32.xlu0 %v1357
  %v1359 = vpop.xlane.xlu0 %1358
  %vm1360 = vcmp.eq.f32.partialorder %v1357, %v1359
  %v1361 = vsel %vm1360, %v1356, inf
  %1362 = vmin.xlane.f32.xlu0 %v1361
  %v1363 = vpop.xlane.xlu0 %1362
  %v1364 = vcvt.f32.s32 %v1363
  %v1365 = vcvt.f32.s32 %v1359
  %v1366 = vshll.u32 %v1365, 16
  %v1367 = vadd.s32 %v1366, %v1364
  %v1368 = vsel %vm1257, %v1324, 2147483647
  %v1369 = vand.u32 %v1368, 65535
  %v1370 = vshra.s32 %v1368, 16
  %v1371 = vcvt.s32.f32 %v1369
  %v1372 = vcvt.s32.f32 %v1370
  %1373 = vmin.xlane.f32.xlu0 %v1372
  %v1374 = vpop.xlane.xlu0 %1373
  %vm1375 = vcmp.eq.f32.partialorder %v1372, %v1374
  %v1376 = vsel %vm1375, %v1371, inf
  %1377 = vmin.xlane.f32.xlu0 %v1376
  %v1378 = vpop.xlane.xlu0 %1377
  %v1379 = vcvt.f32.s32 %v1378
  %v1380 = vcvt.f32.s32 %v1374
  %v1381 = vshll.u32 %v1380, 16
  %v1382 = vadd.s32 %v1381, %v1379
  %v1383 = vsel %vm1257, %v1325, 2147483647
  %v1384 = vand.u32 %v1383, 65535
  %v1385 = vshra.s32 %v1383, 16
  %v1386 = vcvt.s32.f32 %v1384
  %v1387 = vcvt.s32.f32 %v1385
  %1388 = vmin.xlane.f32.xlu0 %v1387
  %v1389 = vpop.xlane.xlu0 %1388
  %vm1390 = vcmp.eq.f32.partialorder %v1387, %v1389
  %v1391 = vsel %vm1390, %v1386, inf
  %1392 = vmin.xlane.f32.xlu0 %v1391
  %v1393 = vpop.xlane.xlu0 %1392
  %v1394 = vcvt.f32.s32 %v1393
  %v1395 = vcvt.f32.s32 %v1389
  %v1396 = vshll.u32 %v1395, 16
  %v1397 = vadd.s32 %v1396, %v1394
  %v1398 = vsel %vm1257, %v1326, 2147483647
  %v1399 = vand.u32 %v1398, 65535
  %v1400 = vshra.s32 %v1398, 16
  %v1401 = vcvt.s32.f32 %v1399
  %v1402 = vcvt.s32.f32 %v1400
  %1403 = vmin.xlane.f32.xlu0 %v1402
  %v1404 = vpop.xlane.xlu0 %1403
  %vm1405 = vcmp.eq.f32.partialorder %v1402, %v1404
  %v1406 = vsel %vm1405, %v1401, inf
  %1407 = vmin.xlane.f32.xlu0 %v1406
  %v1408 = vpop.xlane.xlu0 %1407
  %v1409 = vcvt.f32.s32 %v1408
  %v1410 = vcvt.f32.s32 %v1404
  %v1411 = vshll.u32 %v1410, 16
  %v1412 = vadd.s32 %v1411, %v1409
  %v1413 = vsel %vm1257, %v1327, 2147483647
  %v1414 = vand.u32 %v1413, 65535
  %v1415 = vshra.s32 %v1413, 16
  %v1416 = vcvt.s32.f32 %v1414
  %v1417 = vcvt.s32.f32 %v1415
  %1418 = vmin.xlane.f32.xlu0 %v1417
  %v1419 = vpop.xlane.xlu0 %1418
  %vm1420 = vcmp.eq.f32.partialorder %v1417, %v1419
  %v1421 = vsel %vm1420, %v1416, inf
  %1422 = vmin.xlane.f32.xlu0 %v1421
  %v1423 = vpop.xlane.xlu0 %1422
  %v1424 = vcvt.f32.s32 %v1423
  %v1425 = vcvt.f32.s32 %v1419
  %v1426 = vshll.u32 %v1425, 16
  %v1427 = vadd.s32 %v1426, %v1424
  %v1428 = vsel %vm1257, %v1328, 2147483647
  %v1429 = vand.u32 %v1428, 65535
  %v1430 = vshra.s32 %v1428, 16
  %v1431 = vcvt.s32.f32 %v1429
  %v1432 = vcvt.s32.f32 %v1430
  %1433 = vmin.xlane.f32.xlu0 %v1432
  %v1434 = vpop.xlane.xlu0 %1433
  %vm1435 = vcmp.eq.f32.partialorder %v1432, %v1434
  %v1436 = vsel %vm1435, %v1431, inf
  %1437 = vmin.xlane.f32.xlu0 %v1436
  %v1438 = vpop.xlane.xlu0 %1437
  %v1439 = vcvt.f32.s32 %v1438
  %v1440 = vcvt.f32.s32 %v1434
  %v1441 = vshll.u32 %v1440, 16
  %v1442 = vadd.s32 %v1441, %v1439
  %v1443 = vsel %vm1257, %v1329, 2147483647
  %v1444 = vand.u32 %v1443, 65535
  %v1445 = vshra.s32 %v1443, 16
  %v1446 = vcvt.s32.f32 %v1444
  %v1447 = vcvt.s32.f32 %v1445
  %1448 = vmin.xlane.f32.xlu0 %v1447
  %v1449 = vpop.xlane.xlu0 %1448
  %vm1450 = vcmp.eq.f32.partialorder %v1447, %v1449
  %v1451 = vsel %vm1450, %v1446, inf
  %1452 = vmin.xlane.f32.xlu0 %v1451
  %v1453 = vpop.xlane.xlu0 %1452
  %v1454 = vcvt.f32.s32 %v1453
  %v1455 = vcvt.f32.s32 %v1449
  %v1456 = vshll.u32 %v1455, 16
  %v1457 = vadd.s32 %v1456, %v1454
  %v1458 = vsel %vm1257, %v1330, 2147483647
  %v1459 = vand.u32 %v1458, 65535
  %v1460 = vshra.s32 %v1458, 16
  %v1461 = vcvt.s32.f32 %v1459
  %v1462 = vcvt.s32.f32 %v1460
  %1463 = vmin.xlane.f32.xlu0 %v1462
  %v1464 = vpop.xlane.xlu0 %1463
  %vm1465 = vcmp.eq.f32.partialorder %v1462, %v1464
  %v1466 = vsel %vm1465, %v1461, inf
  %1467 = vmin.xlane.f32.xlu0 %v1466
  %v1468 = vpop.xlane.xlu0 %1467
  %v1469 = vcvt.f32.s32 %v1468
  %v1470 = vcvt.f32.s32 %v1464
  %v1471 = vshll.u32 %v1470, 16
  %v1472 = vadd.s32 %v1471, %v1469
  %v1473 = vsel %vm1257, %v1331, 2147483647
  %v1474 = vand.u32 %v1473, 65535
  %v1475 = vshra.s32 %v1473, 16
  %v1476 = vcvt.s32.f32 %v1474
  %v1477 = vcvt.s32.f32 %v1475
  %1478 = vmin.xlane.f32.xlu0 %v1477
  %v1479 = vpop.xlane.xlu0 %1478
  %vm1480 = vcmp.eq.f32.partialorder %v1477, %v1479
  %v1481 = vsel %vm1480, %v1476, inf
  %1482 = vmin.xlane.f32.xlu0 %v1481
  %v1483 = vpop.xlane.xlu0 %1482
  %v1484 = vcvt.f32.s32 %v1483
  %v1485 = vcvt.f32.s32 %v1479
  %v1486 = vshll.u32 %v1485, 16
  %v1487 = vadd.s32 %v1486, %v1484
  %v1488 = vsel %vm1257, %v1332, 2147483647
  %v1489 = vand.u32 %v1488, 65535
  %v1490 = vshra.s32 %v1488, 16
  %v1491 = vcvt.s32.f32 %v1489
  %v1492 = vcvt.s32.f32 %v1490
  %1493 = vmin.xlane.f32.xlu0 %v1492
  %v1494 = vpop.xlane.xlu0 %1493
  %vm1495 = vcmp.eq.f32.partialorder %v1492, %v1494
  %v1496 = vsel %vm1495, %v1491, inf
  %1497 = vmin.xlane.f32.xlu0 %v1496
  %v1498 = vpop.xlane.xlu0 %1497
  %v1499 = vcvt.f32.s32 %v1498
  %v1500 = vcvt.f32.s32 %v1494
  %v1501 = vshll.u32 %v1500, 16
  %v1502 = vadd.s32 %v1501, %v1499
  %v1503 = vsel %vm1257, %v1333, 2147483647
  %v1504 = vand.u32 %v1503, 65535
  %v1505 = vshra.s32 %v1503, 16
  %v1506 = vcvt.s32.f32 %v1504
  %v1507 = vcvt.s32.f32 %v1505
  %1508 = vmin.xlane.f32.xlu0 %v1507
  %v1509 = vpop.xlane.xlu0 %1508
  %vm1510 = vcmp.eq.f32.partialorder %v1507, %v1509
  %v1511 = vsel %vm1510, %v1506, inf
  %1512 = vmin.xlane.f32.xlu0 %v1511
  %v1513 = vpop.xlane.xlu0 %1512
  %v1514 = vcvt.f32.s32 %v1513
  %v1515 = vcvt.f32.s32 %v1509
  %v1516 = vshll.u32 %v1515, 16
  %v1517 = vadd.s32 %v1516, %v1514
  %v1518 = vsel %vm1257, %v1334, 2147483647
  %v1519 = vand.u32 %v1518, 65535
  %v1520 = vshra.s32 %v1518, 16
  %v1521 = vcvt.s32.f32 %v1519
  %v1522 = vcvt.s32.f32 %v1520
  %1523 = vmin.xlane.f32.xlu0 %v1522
  %v1524 = vpop.xlane.xlu0 %1523
  %vm1525 = vcmp.eq.f32.partialorder %v1522, %v1524
  %v1526 = vsel %vm1525, %v1521, inf
  %1527 = vmin.xlane.f32.xlu0 %v1526
  %v1528 = vpop.xlane.xlu0 %1527
  %v1529 = vcvt.f32.s32 %v1528
  %v1530 = vcvt.f32.s32 %v1524
  %v1531 = vshll.u32 %v1530, 16
  %v1532 = vadd.s32 %v1531, %v1529
  %v1533 = vsel %vm1257, %v1335, 2147483647
  %v1534 = vand.u32 %v1533, 65535
  %v1535 = vshra.s32 %v1533, 16
  %v1536 = vcvt.s32.f32 %v1534
  %v1537 = vcvt.s32.f32 %v1535
  %1538 = vmin.xlane.f32.xlu0 %v1537
  %v1539 = vpop.xlane.xlu0 %1538
  %vm1540 = vcmp.eq.f32.partialorder %v1537, %v1539
  %v1541 = vsel %vm1540, %v1536, inf
  %1542 = vmin.xlane.f32.xlu0 %v1541
  %v1543 = vpop.xlane.xlu0 %1542
  %v1544 = vcvt.f32.s32 %v1543
  %v1545 = vcvt.f32.s32 %v1539
  %v1546 = vshll.u32 %v1545, 16
  %v1547 = vadd.s32 %v1546, %v1544
  %v1548 = vsel %vm1257, %v1336, 2147483647
  %v1549 = vand.u32 %v1548, 65535
  %v1550 = vshra.s32 %v1548, 16
  %v1551 = vcvt.s32.f32 %v1549
  %v1552 = vcvt.s32.f32 %v1550
  %1553 = vmin.xlane.f32.xlu0 %v1552
  %v1554 = vpop.xlane.xlu0 %1553
  %vm1555 = vcmp.eq.f32.partialorder %v1552, %v1554
  %v1556 = vsel %vm1555, %v1551, inf
  %1557 = vmin.xlane.f32.xlu0 %v1556
  %v1558 = vpop.xlane.xlu0 %1557
  %v1559 = vcvt.f32.s32 %v1558
  %v1560 = vcvt.f32.s32 %v1554
  %v1561 = vshll.u32 %v1560, 16
  %v1562 = vadd.s32 %v1561, %v1559
  %v1563 = vsel %vm1257, %v1337, 2147483647
  %v1564 = vand.u32 %v1563, 65535
  %v1565 = vshra.s32 %v1563, 16
  %v1566 = vcvt.s32.f32 %v1564
  %v1567 = vcvt.s32.f32 %v1565
  %1568 = vmin.xlane.f32.xlu0 %v1567
  %v1569 = vpop.xlane.xlu0 %1568
  %vm1570 = vcmp.eq.f32.partialorder %v1567, %v1569
  %v1571 = vsel %vm1570, %v1566, inf
  %1572 = vmin.xlane.f32.xlu0 %v1571
  %v1573 = vpop.xlane.xlu0 %1572
  %v1574 = vcvt.f32.s32 %v1573
  %v1575 = vcvt.f32.s32 %v1569
  %v1576 = vshll.u32 %v1575, 16
  %v1577 = vadd.s32 %v1576, %v1574
  %vm1578 = vcmask 64560
  %v1579 = vsel %vm1578, %v1216, -inf
  %1580 = vmax.xlane.f32.xlu0 %v1579
  %v1581 = vpop.xlane.xlu0 %1580
  %v1582 = vsel %vm1578, %v1218, -inf
  %1583 = vmax.xlane.f32.xlu0 %v1582
  %v1584 = vpop.xlane.xlu0 %1583
  %v1585 = vsel %vm1578, %v1221, -inf
  %1586 = vmax.xlane.f32.xlu0 %v1585
  %v1587 = vpop.xlane.xlu0 %1586
  %v1588 = vsel %vm1578, %v1223, -inf
  %1589 = vmax.xlane.f32.xlu0 %v1588
  %v1590 = vpop.xlane.xlu0 %1589
  %v1591 = vsel %vm1578, %v1226, -inf
  %1592 = vmax.xlane.f32.xlu0 %v1591
  %v1593 = vpop.xlane.xlu0 %1592
  %v1594 = vsel %vm1578, %v1228, -inf
  %1595 = vmax.xlane.f32.xlu0 %v1594
  %v1596 = vpop.xlane.xlu0 %1595
  %v1597 = vsel %vm1578, %v1231, -inf
  %1598 = vmax.xlane.f32.xlu0 %v1597
  %v1599 = vpop.xlane.xlu0 %1598
  %v1600 = vsel %vm1578, %v1233, -inf
  %1601 = vmax.xlane.f32.xlu0 %v1600
  %v1602 = vpop.xlane.xlu0 %1601
  %v1603 = vsel %vm1578, %v1236, -inf
  %1604 = vmax.xlane.f32.xlu0 %v1603
  %v1605 = vpop.xlane.xlu0 %1604
  %v1606 = vsel %vm1578, %v1238, -inf
  %1607 = vmax.xlane.f32.xlu0 %v1606
  %v1608 = vpop.xlane.xlu0 %1607
  %v1609 = vsel %vm1578, %v1241, -inf
  %1610 = vmax.xlane.f32.xlu0 %v1609
  %v1611 = vpop.xlane.xlu0 %1610
  %v1612 = vsel %vm1578, %v1243, -inf
  %1613 = vmax.xlane.f32.xlu0 %v1612
  %v1614 = vpop.xlane.xlu0 %1613
  %v1615 = vsel %vm1578, %v1246, -inf
  %1616 = vmax.xlane.f32.xlu0 %v1615
  %v1617 = vpop.xlane.xlu0 %1616
  %v1618 = vsel %vm1578, %v1248, -inf
  %1619 = vmax.xlane.f32.xlu0 %v1618
  %v1620 = vpop.xlane.xlu0 %1619
  %v1621 = vsel %vm1578, %v1251, -inf
  %1622 = vmax.xlane.f32.xlu0 %v1621
  %v1623 = vpop.xlane.xlu0 %1622
  %v1624 = vsel %vm1578, %v1253, -inf
  %1625 = vmax.xlane.f32.xlu0 %v1624
  %v1626 = vpop.xlane.xlu0 %1625
  %vm1627 = vcmp.eq.f32.partialorder %v1216, %v1581
  %vm1628 = vcmp.eq.f32.partialorder %v1218, %v1584
  %vm1629 = vcmp.eq.f32.partialorder %v1221, %v1587
  %vm1630 = vcmp.eq.f32.partialorder %v1223, %v1590
  %vm1631 = vcmp.eq.f32.partialorder %v1226, %v1593
  %vm1632 = vcmp.eq.f32.partialorder %v1228, %v1596
  %vm1633 = vcmp.eq.f32.partialorder %v1231, %v1599
  %vm1634 = vcmp.eq.f32.partialorder %v1233, %v1602
  %vm1635 = vcmp.eq.f32.partialorder %v1236, %v1605
  %vm1636 = vcmp.eq.f32.partialorder %v1238, %v1608
  %vm1637 = vcmp.eq.f32.partialorder %v1241, %v1611
  %vm1638 = vcmp.eq.f32.partialorder %v1243, %v1614
  %vm1639 = vcmp.eq.f32.partialorder %v1246, %v1617
  %vm1640 = vcmp.eq.f32.partialorder %v1248, %v1620
  %vm1641 = vcmp.eq.f32.partialorder %v1251, %v1623
  %vm1642 = vcmp.eq.f32.partialorder %v1253, %v1626
  %1643 = vrot.lane.b32.xlu0 %v1256, 6
  %v1644 = vpop.permute.xlu0 %1643
  %v1645 = vsel %vm1627, %v1644, 2
  %v1646 = vsel %vm1628, %v1644, 2
  %v1647 = vsel %vm1629, %v1644, 2
  %v1648 = vsel %vm1630, %v1644, 2
  %v1649 = vsel %vm1631, %v1644, 2
  %v1650 = vsel %vm1632, %v1644, 2
  %v1651 = vsel %vm1633, %v1644, 2
  %v1652 = vsel %vm1634, %v1644, 2
  %v1653 = vsel %vm1635, %v1644, 2
  %v1654 = vsel %vm1636, %v1644, 2
  %v1655 = vsel %vm1637, %v1644, 2
  %v1656 = vsel %vm1638, %v1644, 2
  %v1657 = vsel %vm1639, %v1644, 2
  %v1658 = vsel %vm1640, %v1644, 2
  %v1659 = vsel %vm1641, %v1644, 2
  %v1660 = vsel %vm1642, %v1644, 2
  %v1661 = vsel %vm1578, %v1645, 2147483647
  %v1662 = vand.u32 %v1661, 65535
  %v1663 = vshra.s32 %v1661, 16
  %v1664 = vcvt.s32.f32 %v1662
  %v1665 = vcvt.s32.f32 %v1663
  %1666 = vmin.xlane.f32.xlu0 %v1665
  %v1667 = vpop.xlane.xlu0 %1666
  %vm1668 = vcmp.eq.f32.partialorder %v1665, %v1667
  %v1669 = vsel %vm1668, %v1664, inf
  %1670 = vmin.xlane.f32.xlu0 %v1669
  %v1671 = vpop.xlane.xlu0 %1670
  %v1672 = vcvt.f32.s32 %v1671
  %v1673 = vcvt.f32.s32 %v1667
  %v1674 = vshll.u32 %v1673, 16
  %v1675 = vadd.s32 %v1674, %v1672
  %v1676 = vsel %vm1578, %v1646, 2147483647
  %v1677 = vand.u32 %v1676, 65535
  %v1678 = vshra.s32 %v1676, 16
  %v1679 = vcvt.s32.f32 %v1677
  %v1680 = vcvt.s32.f32 %v1678
  %1681 = vmin.xlane.f32.xlu0 %v1680
  %v1682 = vpop.xlane.xlu0 %1681
  %vm1683 = vcmp.eq.f32.partialorder %v1680, %v1682
  %v1684 = vsel %vm1683, %v1679, inf
  %1685 = vmin.xlane.f32.xlu0 %v1684
  %v1686 = vpop.xlane.xlu0 %1685
  %v1687 = vcvt.f32.s32 %v1686
  %v1688 = vcvt.f32.s32 %v1682
  %v1689 = vshll.u32 %v1688, 16
  %v1690 = vadd.s32 %v1689, %v1687
  %v1691 = vsel %vm1578, %v1647, 2147483647
  %v1692 = vand.u32 %v1691, 65535
  %v1693 = vshra.s32 %v1691, 16
  %v1694 = vcvt.s32.f32 %v1692
  %v1695 = vcvt.s32.f32 %v1693
  %1696 = vmin.xlane.f32.xlu0 %v1695
  %v1697 = vpop.xlane.xlu0 %1696
  %vm1698 = vcmp.eq.f32.partialorder %v1695, %v1697
  %v1699 = vsel %vm1698, %v1694, inf
  %1700 = vmin.xlane.f32.xlu0 %v1699
  %v1701 = vpop.xlane.xlu0 %1700
  %v1702 = vcvt.f32.s32 %v1701
  %v1703 = vcvt.f32.s32 %v1697
  %v1704 = vshll.u32 %v1703, 16
  %v1705 = vadd.s32 %v1704, %v1702
  %v1706 = vsel %vm1578, %v1648, 2147483647
  %v1707 = vand.u32 %v1706, 65535
  %v1708 = vshra.s32 %v1706, 16
  %v1709 = vcvt.s32.f32 %v1707
  %v1710 = vcvt.s32.f32 %v1708
  %1711 = vmin.xlane.f32.xlu0 %v1710
  %v1712 = vpop.xlane.xlu0 %1711
  %vm1713 = vcmp.eq.f32.partialorder %v1710, %v1712
  %v1714 = vsel %vm1713, %v1709, inf
  %1715 = vmin.xlane.f32.xlu0 %v1714
  %v1716 = vpop.xlane.xlu0 %1715
  %v1717 = vcvt.f32.s32 %v1716
  %v1718 = vcvt.f32.s32 %v1712
  %v1719 = vshll.u32 %v1718, 16
  %v1720 = vadd.s32 %v1719, %v1717
  %v1721 = vsel %vm1578, %v1649, 2147483647
  %v1722 = vand.u32 %v1721, 65535
  %v1723 = vshra.s32 %v1721, 16
  %v1724 = vcvt.s32.f32 %v1722
  %v1725 = vcvt.s32.f32 %v1723
  %1726 = vmin.xlane.f32.xlu0 %v1725
  %v1727 = vpop.xlane.xlu0 %1726
  %vm1728 = vcmp.eq.f32.partialorder %v1725, %v1727
  %v1729 = vsel %vm1728, %v1724, inf
  %1730 = vmin.xlane.f32.xlu0 %v1729
  %v1731 = vpop.xlane.xlu0 %1730
  %v1732 = vcvt.f32.s32 %v1731
  %v1733 = vcvt.f32.s32 %v1727
  %v1734 = vshll.u32 %v1733, 16
  %v1735 = vadd.s32 %v1734, %v1732
  %v1736 = vsel %vm1578, %v1650, 2147483647
  %v1737 = vand.u32 %v1736, 65535
  %v1738 = vshra.s32 %v1736, 16
  %v1739 = vcvt.s32.f32 %v1737
  %v1740 = vcvt.s32.f32 %v1738
  %1741 = vmin.xlane.f32.xlu0 %v1740
  %v1742 = vpop.xlane.xlu0 %1741
  %vm1743 = vcmp.eq.f32.partialorder %v1740, %v1742
  %v1744 = vsel %vm1743, %v1739, inf
  %1745 = vmin.xlane.f32.xlu0 %v1744
  %v1746 = vpop.xlane.xlu0 %1745
  %v1747 = vcvt.f32.s32 %v1746
  %v1748 = vcvt.f32.s32 %v1742
  %v1749 = vshll.u32 %v1748, 16
  %v1750 = vadd.s32 %v1749, %v1747
  %v1751 = vsel %vm1578, %v1651, 2147483647
  %v1752 = vand.u32 %v1751, 65535
  %v1753 = vshra.s32 %v1751, 16
  %v1754 = vcvt.s32.f32 %v1752
  %v1755 = vcvt.s32.f32 %v1753
  %1756 = vmin.xlane.f32.xlu0 %v1755
  %v1757 = vpop.xlane.xlu0 %1756
  %vm1758 = vcmp.eq.f32.partialorder %v1755, %v1757
  %v1759 = vsel %vm1758, %v1754, inf
  %1760 = vmin.xlane.f32.xlu0 %v1759
  %v1761 = vpop.xlane.xlu0 %1760
  %v1762 = vcvt.f32.s32 %v1761
  %v1763 = vcvt.f32.s32 %v1757
  %v1764 = vshll.u32 %v1763, 16
  %v1765 = vadd.s32 %v1764, %v1762
  %v1766 = vsel %vm1578, %v1652, 2147483647
  %v1767 = vand.u32 %v1766, 65535
  %v1768 = vshra.s32 %v1766, 16
  %v1769 = vcvt.s32.f32 %v1767
  %v1770 = vcvt.s32.f32 %v1768
  %1771 = vmin.xlane.f32.xlu0 %v1770
  %v1772 = vpop.xlane.xlu0 %1771
  %vm1773 = vcmp.eq.f32.partialorder %v1770, %v1772
  %v1774 = vsel %vm1773, %v1769, inf
  %1775 = vmin.xlane.f32.xlu0 %v1774
  %v1776 = vpop.xlane.xlu0 %1775
  %v1777 = vcvt.f32.s32 %v1776
  %v1778 = vcvt.f32.s32 %v1772
  %v1779 = vshll.u32 %v1778, 16
  %v1780 = vadd.s32 %v1779, %v1777
  %v1781 = vsel %vm1578, %v1653, 2147483647
  %v1782 = vand.u32 %v1781, 65535
  %v1783 = vshra.s32 %v1781, 16
  %v1784 = vcvt.s32.f32 %v1782
  %v1785 = vcvt.s32.f32 %v1783
  %1786 = vmin.xlane.f32.xlu0 %v1785
  %v1787 = vpop.xlane.xlu0 %1786
  %vm1788 = vcmp.eq.f32.partialorder %v1785, %v1787
  %v1789 = vsel %vm1788, %v1784, inf
  %1790 = vmin.xlane.f32.xlu0 %v1789
  %v1791 = vpop.xlane.xlu0 %1790
  %v1792 = vcvt.f32.s32 %v1791
  %v1793 = vcvt.f32.s32 %v1787
  %v1794 = vshll.u32 %v1793, 16
  %v1795 = vadd.s32 %v1794, %v1792
  %v1796 = vsel %vm1578, %v1654, 2147483647
  %v1797 = vand.u32 %v1796, 65535
  %v1798 = vshra.s32 %v1796, 16
  %v1799 = vcvt.s32.f32 %v1797
  %v1800 = vcvt.s32.f32 %v1798
  %1801 = vmin.xlane.f32.xlu0 %v1800
  %v1802 = vpop.xlane.xlu0 %1801
  %vm1803 = vcmp.eq.f32.partialorder %v1800, %v1802
  %v1804 = vsel %vm1803, %v1799, inf
  %1805 = vmin.xlane.f32.xlu0 %v1804
  %v1806 = vpop.xlane.xlu0 %1805
  %v1807 = vcvt.f32.s32 %v1806
  %v1808 = vcvt.f32.s32 %v1802
  %v1809 = vshll.u32 %v1808, 16
  %v1810 = vadd.s32 %v1809, %v1807
  %v1811 = vsel %vm1578, %v1655, 2147483647
  %v1812 = vand.u32 %v1811, 65535
  %v1813 = vshra.s32 %v1811, 16
  %v1814 = vcvt.s32.f32 %v1812
  %v1815 = vcvt.s32.f32 %v1813
  %1816 = vmin.xlane.f32.xlu0 %v1815
  %v1817 = vpop.xlane.xlu0 %1816
  %vm1818 = vcmp.eq.f32.partialorder %v1815, %v1817
  %v1819 = vsel %vm1818, %v1814, inf
  %1820 = vmin.xlane.f32.xlu0 %v1819
  %v1821 = vpop.xlane.xlu0 %1820
  %v1822 = vcvt.f32.s32 %v1821
  %v1823 = vcvt.f32.s32 %v1817
  %v1824 = vshll.u32 %v1823, 16
  %v1825 = vadd.s32 %v1824, %v1822
  %v1826 = vsel %vm1578, %v1656, 2147483647
  %v1827 = vand.u32 %v1826, 65535
  %v1828 = vshra.s32 %v1826, 16
  %v1829 = vcvt.s32.f32 %v1827
  %v1830 = vcvt.s32.f32 %v1828
  %1831 = vmin.xlane.f32.xlu0 %v1830
  %v1832 = vpop.xlane.xlu0 %1831
  %vm1833 = vcmp.eq.f32.partialorder %v1830, %v1832
  %v1834 = vsel %vm1833, %v1829, inf
  %1835 = vmin.xlane.f32.xlu0 %v1834
  %v1836 = vpop.xlane.xlu0 %1835
  %v1837 = vcvt.f32.s32 %v1836
  %v1838 = vcvt.f32.s32 %v1832
  %v1839 = vshll.u32 %v1838, 16
  %v1840 = vadd.s32 %v1839, %v1837
  %v1841 = vsel %vm1578, %v1657, 2147483647
  %v1842 = vand.u32 %v1841, 65535
  %v1843 = vshra.s32 %v1841, 16
  %v1844 = vcvt.s32.f32 %v1842
  %v1845 = vcvt.s32.f32 %v1843
  %1846 = vmin.xlane.f32.xlu0 %v1845
  %v1847 = vpop.xlane.xlu0 %1846
  %vm1848 = vcmp.eq.f32.partialorder %v1845, %v1847
  %v1849 = vsel %vm1848, %v1844, inf
  %1850 = vmin.xlane.f32.xlu0 %v1849
  %v1851 = vpop.xlane.xlu0 %1850
  %v1852 = vcvt.f32.s32 %v1851
  %v1853 = vcvt.f32.s32 %v1847
  %v1854 = vshll.u32 %v1853, 16
  %v1855 = vadd.s32 %v1854, %v1852
  %v1856 = vsel %vm1578, %v1658, 2147483647
  %v1857 = vand.u32 %v1856, 65535
  %v1858 = vshra.s32 %v1856, 16
  %v1859 = vcvt.s32.f32 %v1857
  %v1860 = vcvt.s32.f32 %v1858
  %1861 = vmin.xlane.f32.xlu0 %v1860
  %v1862 = vpop.xlane.xlu0 %1861
  %vm1863 = vcmp.eq.f32.partialorder %v1860, %v1862
  %v1864 = vsel %vm1863, %v1859, inf
  %1865 = vmin.xlane.f32.xlu0 %v1864
  %v1866 = vpop.xlane.xlu0 %1865
  %v1867 = vcvt.f32.s32 %v1866
  %v1868 = vcvt.f32.s32 %v1862
  %v1869 = vshll.u32 %v1868, 16
  %v1870 = vadd.s32 %v1869, %v1867
  %v1871 = vsel %vm1578, %v1659, 2147483647
  %v1872 = vand.u32 %v1871, 65535
  %v1873 = vshra.s32 %v1871, 16
  %v1874 = vcvt.s32.f32 %v1872
  %v1875 = vcvt.s32.f32 %v1873
  %1876 = vmin.xlane.f32.xlu0 %v1875
  %v1877 = vpop.xlane.xlu0 %1876
  %vm1878 = vcmp.eq.f32.partialorder %v1875, %v1877
  %v1879 = vsel %vm1878, %v1874, inf
  %1880 = vmin.xlane.f32.xlu0 %v1879
  %v1881 = vpop.xlane.xlu0 %1880
  %v1882 = vcvt.f32.s32 %v1881
  %v1883 = vcvt.f32.s32 %v1877
  %v1884 = vshll.u32 %v1883, 16
  %v1885 = vadd.s32 %v1884, %v1882
  %v1886 = vsel %vm1578, %v1660, 2147483647
  %v1887 = vand.u32 %v1886, 65535
  %v1888 = vshra.s32 %v1886, 16
  %v1889 = vcvt.s32.f32 %v1887
  %v1890 = vcvt.s32.f32 %v1888
  %1891 = vmin.xlane.f32.xlu0 %v1890
  %v1892 = vpop.xlane.xlu0 %1891
  %vm1893 = vcmp.eq.f32.partialorder %v1890, %v1892
  %v1894 = vsel %vm1893, %v1889, inf
  %1895 = vmin.xlane.f32.xlu0 %v1894
  %v1896 = vpop.xlane.xlu0 %1895
  %v1897 = vcvt.f32.s32 %v1896
  %v1898 = vcvt.f32.s32 %v1892
  %v1899 = vshll.u32 %v1898, 16
  %v1900 = vadd.s32 %v1899, %v1897
  %vm1901 = vcmp.eq.s32.totalorder %v1675, 0
  %vm1902 = vcmp.eq.s32.totalorder %v1690, 0
  %vm1903 = vcmp.eq.s32.totalorder %v1705, 0
  %vm1904 = vcmp.eq.s32.totalorder %v1720, 0
  %vm1905 = vcmp.eq.s32.totalorder %v1735, 0
  %vm1906 = vcmp.eq.s32.totalorder %v1750, 0
  %vm1907 = vcmp.eq.s32.totalorder %v1765, 0
  %vm1908 = vcmp.eq.s32.totalorder %v1780, 0
  %vm1909 = vcmp.eq.s32.totalorder %v1795, 0
  %vm1910 = vcmp.eq.s32.totalorder %v1810, 0
  %vm1911 = vcmp.eq.s32.totalorder %v1825, 0
  %vm1912 = vcmp.eq.s32.totalorder %v1840, 0
  %vm1913 = vcmp.eq.s32.totalorder %v1855, 0
  %vm1914 = vcmp.eq.s32.totalorder %v1870, 0
  %vm1915 = vcmp.eq.s32.totalorder %v1885, 0
  %vm1916 = vcmp.eq.s32.totalorder %v1900, 0
  %v1917 = vsel %vm1901, 4, 5
  %v1918 = vsel %vm1902, 4, 5
  %v1919 = vsel %vm1903, 4, 5
  %v1920 = vsel %vm1904, 4, 5
  %v1921 = vsel %vm1905, 4, 5
  %v1922 = vsel %vm1906, 4, 5
  %v1923 = vsel %vm1907, 4, 5
  %v1924 = vsel %vm1908, 4, 5
  %v1925 = vsel %vm1909, 4, 5
  %v1926 = vsel %vm1910, 4, 5
  %v1927 = vsel %vm1911, 4, 5
  %v1928 = vsel %vm1912, 4, 5
  %v1929 = vsel %vm1913, 4, 5
  %v1930 = vsel %vm1914, 4, 5
  %v1931 = vsel %vm1915, 4, 5
  %v1932 = vsel %vm1916, 4, 5
  %vm1933 = vcmp.eq.s32.totalorder %v1352, 4
  %vm1934 = vcmp.eq.s32.totalorder %v1367, 4
  %vm1935 = vcmp.eq.s32.totalorder %v1382, 4
  %vm1936 = vcmp.eq.s32.totalorder %v1397, 4
  %vm1937 = vcmp.eq.s32.totalorder %v1412, 4
  %vm1938 = vcmp.eq.s32.totalorder %v1427, 4
  %vm1939 = vcmp.eq.s32.totalorder %v1442, 4
  %vm1940 = vcmp.eq.s32.totalorder %v1457, 4
  %vm1941 = vcmp.eq.s32.totalorder %v1472, 4
  %vm1942 = vcmp.eq.s32.totalorder %v1487, 4
  %vm1943 = vcmp.eq.s32.totalorder %v1502, 4
  %vm1944 = vcmp.eq.s32.totalorder %v1517, 4
  %vm1945 = vcmp.eq.s32.totalorder %v1532, 4
  %vm1946 = vcmp.eq.s32.totalorder %v1547, 4
  %vm1947 = vcmp.eq.s32.totalorder %v1562, 4
  %vm1948 = vcmp.eq.s32.totalorder %v1577, 4
  %vm1949 = vcmp.eq.s32.totalorder %v1352, 5
  %vm1950 = vcmp.eq.s32.totalorder %v1367, 5
  %vm1951 = vcmp.eq.s32.totalorder %v1382, 5
  %vm1952 = vcmp.eq.s32.totalorder %v1397, 5
  %vm1953 = vcmp.eq.s32.totalorder %v1412, 5
  %vm1954 = vcmp.eq.s32.totalorder %v1427, 5
  %vm1955 = vcmp.eq.s32.totalorder %v1442, 5
  %vm1956 = vcmp.eq.s32.totalorder %v1457, 5
  %vm1957 = vcmp.eq.s32.totalorder %v1472, 5
  %vm1958 = vcmp.eq.s32.totalorder %v1487, 5
  %vm1959 = vcmp.eq.s32.totalorder %v1502, 5
  %vm1960 = vcmp.eq.s32.totalorder %v1517, 5
  %vm1961 = vcmp.eq.s32.totalorder %v1532, 5
  %vm1962 = vcmp.eq.s32.totalorder %v1547, 5
  %vm1963 = vcmp.eq.s32.totalorder %v1562, 5
  %vm1964 = vcmp.eq.s32.totalorder %v1577, 5
  %vm1965 = vmor %vm1933, %vm1949
  %vm1966 = vmor %vm1934, %vm1950
  %vm1967 = vmor %vm1935, %vm1951
  %vm1968 = vmor %vm1936, %vm1952
  %vm1969 = vmor %vm1937, %vm1953
  %vm1970 = vmor %vm1938, %vm1954
  %vm1971 = vmor %vm1939, %vm1955
  %vm1972 = vmor %vm1940, %vm1956
  %vm1973 = vmor %vm1941, %vm1957
  %vm1974 = vmor %vm1942, %vm1958
  %vm1975 = vmor %vm1943, %vm1959
  %vm1976 = vmor %vm1944, %vm1960
  %vm1977 = vmor %vm1945, %vm1961
  %vm1978 = vmor %vm1946, %vm1962
  %vm1979 = vmor %vm1947, %vm1963
  %vm1980 = vmor %vm1948, %vm1964
  %v1981 = vsel %vm1965, %v1917, %v1352
  %v1982 = vsel %vm1966, %v1918, %v1367
  %v1983 = vsel %vm1967, %v1919, %v1382
  %v1984 = vsel %vm1968, %v1920, %v1397
  %v1985 = vsel %vm1969, %v1921, %v1412
  %v1986 = vsel %vm1970, %v1922, %v1427
  %v1987 = vsel %vm1971, %v1923, %v1442
  %v1988 = vsel %vm1972, %v1924, %v1457
  %v1989 = vsel %vm1973, %v1925, %v1472
  %v1990 = vsel %vm1974, %v1926, %v1487
  %v1991 = vsel %vm1975, %v1927, %v1502
  %v1992 = vsel %vm1976, %v1928, %v1517
  %v1993 = vsel %vm1977, %v1929, %v1532
  %v1994 = vsel %vm1978, %v1930, %v1547
  %v1995 = vsel %vm1979, %v1931, %v1562
  %v1996 = vsel %vm1980, %v1932, %v1577
  %v1997 = vcvt.s32.f32 %v1981
  %v1998 = vcvt.s32.f32 %v1982
  %v1999 = vcvt.s32.f32 %v1983
  %v2000 = vcvt.s32.f32 %v1984
  %v2001 = vcvt.s32.f32 %v1985
  %v2002 = vcvt.s32.f32 %v1986
  %v2003 = vcvt.s32.f32 %v1987
  %v2004 = vcvt.s32.f32 %v1988
  %v2005 = vcvt.s32.f32 %v1989
  %v2006 = vcvt.s32.f32 %v1990
  %v2007 = vcvt.s32.f32 %v1991
  %v2008 = vcvt.s32.f32 %v1992
  %v2009 = vcvt.s32.f32 %v1993
  %v2010 = vcvt.s32.f32 %v1994
  %v2011 = vcvt.s32.f32 %v1995
  %v2012 = vcvt.s32.f32 %v1996
  %v2013 = vlaneseq
  %v2014 = vshrl.u32 %v2013, 7
  %v2015 = vadd.s32 %v2014, 8
  %v2016 = vadd.s32 %v2014, 16
  %v2017 = vadd.s32 %v2014, 24
  %v2018 = vadd.s32 %v2014, 32
  %v2019 = vadd.s32 %v2014, 40
  %v2020 = vadd.s32 %v2014, 48
  %v2021 = vadd.s32 %v2014, 56
  %v2022 = vadd.s32 %v2014, 64
  %v2023 = vadd.s32 %v2014, 72
  %v2024 = vadd.s32 %v2014, 80
  %v2025 = vadd.s32 %v2014, 88
  %v2026 = vadd.s32 %v2014, 96
  %v2027 = vadd.s32 %v2014, 104
  %v2028 = vadd.s32 %v2014, 112
  %v2029 = vadd.s32 %v2014, 120
  %vm2030 = vcmp.eq.s32.totalorder %v2014, %v1256
  %vm2031 = vcmp.eq.s32.totalorder %v2015, %v1256
  %vm2032 = vcmp.eq.s32.totalorder %v2016, %v1256
  %vm2033 = vcmp.eq.s32.totalorder %v2017, %v1256
  %vm2034 = vcmp.eq.s32.totalorder %v2018, %v1256
  %vm2035 = vcmp.eq.s32.totalorder %v2019, %v1256
  %vm2036 = vcmp.eq.s32.totalorder %v2020, %v1256
  %vm2037 = vcmp.eq.s32.totalorder %v2021, %v1256
  %vm2038 = vcmp.eq.s32.totalorder %v2022, %v1256
  %vm2039 = vcmp.eq.s32.totalorder %v2023, %v1256
  %vm2040 = vcmp.eq.s32.totalorder %v2024, %v1256
  %vm2041 = vcmp.eq.s32.totalorder %v2025, %v1256
  %vm2042 = vcmp.eq.s32.totalorder %v2026, %v1256
  %vm2043 = vcmp.eq.s32.totalorder %v2027, %v1256
  %vm2044 = vcmp.eq.s32.totalorder %v2028, %v1256
  %vm2045 = vcmp.eq.s32.totalorder %v2029, %v1256
  %v2046 = vsel %vm2030, %v1997, 0.0
  %v2047 = vsel %vm2031, %v1998, 0.0
  %v2048 = vsel %vm2032, %v1999, 0.0
  %v2049 = vsel %vm2033, %v2000, 0.0
  %v2050 = vsel %vm2034, %v2001, 0.0
  %v2051 = vsel %vm2035, %v2002, 0.0
  %v2052 = vsel %vm2036, %v2003, 0.0
  %v2053 = vsel %vm2037, %v2004, 0.0
  %v2054 = vsel %vm2038, %v2005, 0.0
  %v2055 = vsel %vm2039, %v2006, 0.0
  %v2056 = vsel %vm2040, %v2007, 0.0
  %v2057 = vsel %vm2041, %v2008, 0.0
  %v2058 = vsel %vm2042, %v2009, 0.0
  %v2059 = vsel %vm2043, %v2010, 0.0
  %v2060 = vsel %vm2044, %v2011, 0.0
  %v2061 = vsel %vm2045, %v2012, 0.0
  %v2062 = vadd.f32 %v2046, %v2047
  %v2063 = vadd.f32 %v2062, %v2048
  %v2064 = vadd.f32 %v2063, %v2049
  %v2065 = vadd.f32 %v2064, %v2050
  %v2066 = vadd.f32 %v2065, %v2051
  %v2067 = vadd.f32 %v2066, %v2052
  %v2068 = vadd.f32 %v2067, %v2053
  %v2069 = vadd.f32 %v2068, %v2054
  %v2070 = vadd.f32 %v2069, %v2055
  %v2071 = vadd.f32 %v2070, %v2056
  %v2072 = vadd.f32 %v2071, %v2057
  %v2073 = vadd.f32 %v2072, %v2058
  %v2074 = vadd.f32 %v2073, %v2059
  %v2075 = vadd.f32 %v2074, %v2060
  %v2076 = vadd.f32 %v2075, %v2061
  %v2077 = vrot.slane %v2076, 4
  %v2078 = vadd.f32 %v2076, %v2077
  %v2079 = vrot.slane %v2078, 2
  %v2080 = vadd.f32 %v2078, %v2079
  %v2081 = vrot.slane %v2080, 1
  %v2082 = vadd.f32 %v2080, %v2081
  %v2083 = vcvt.f32.s32.to.zero.pseudo %v2082
  %2084 = vst [vmem:[%s5] sm:$0x1] %v2083
  // Predicated region
  $region22: #{complete_classifier.1} parent=0 // pred_check
    _
  $region23: #{complete_classifier.1} parent=0 // pred_check_branch
    %2086 = sbr.rel (0) target = $region25
  $region24: #{complete_classifier.1} parent=0 // pred_region
    _
  $region25: #{complete_classifier.1} parent=0 // pred_fallthru
    _
  // Predicated region
  $region26: #{complete_classifier.1} parent=0 // pred_check
    _
  $region27: #{complete_classifier.1} parent=0 // pred_check_branch
    %2088 = sbr.rel (0) target = $region29
  $region28: #{complete_classifier.1} parent=0 // pred_region
    _
  $region29: #{complete_classifier.1} parent=0 // pred_fallthru
    _

</llo_original>
